<compile_context>
chip_gen: v5e
topology: v5e:2x2
jax: 0.10.0
libtpu: 0.0.40
codegen_flags: <defaults>
</compile_context>

<pallas_src>
from functools import partial

import jax
import jax.numpy as jnp
from jax.experimental import pallas as pl
from jax.experimental.pallas import tpu as pltpu

# MXU operand dtype (f32 accumulation via preferred_element_type).
_MXU_DTYPE = jnp.bfloat16


# ------------------------------ kernel helpers ------------------------------ #

def _linear(x, w, b):
    """y = x @ w + b with bf16 MXU operands, f32 accumulation."""
    return jnp.dot(x.astype(_MXU_DTYPE), w.astype(_MXU_DTYPE),
                   preferred_element_type=jnp.float32) + b


def _layer_norm(x, gamma, beta, eps=1e-5):
    mean = jnp.mean(x, axis=-1, keepdims=True)
    var = jnp.mean(jnp.square(x - mean), axis=-1, keepdims=True)
    return (x - mean) * jax.lax.rsqrt(var + eps) * gamma + beta


def _mha(x_q, x_kv, wq3, bq3, wk3, bk3, wv3, bv3, wo3, bo, num_heads):
    """Multi-head attention with heads batched into one dot_general per stage.

    x_q: [Sq, D] f32, x_kv: [Sk, D] f32.
    wq3/wk3/wv3: [H, D, dh], bq3/bk3/bv3: [H, 1, dh], wo3: [H, dh, D], bo: [1, D].
    """
    sq, d_model = x_q.shape
    sk = x_kv.shape[0]
    d_head = d_model // num_heads

    xq_b = jnp.broadcast_to(x_q.astype(_MXU_DTYPE), (num_heads, sq, d_model))
    xkv_b = jnp.broadcast_to(x_kv.astype(_MXU_DTYPE), (num_heads, sk, d_model))

    qh = jnp.einsum('hsd,hdf->hsf', xq_b, wq3.astype(_MXU_DTYPE),
                    preferred_element_type=jnp.float32) + bq3
    kh = jnp.einsum('hsd,hdf->hsf', xkv_b, wk3.astype(_MXU_DTYPE),
                    preferred_element_type=jnp.float32) + bk3
    vh = jnp.einsum('hsd,hdf->hsf', xkv_b, wv3.astype(_MXU_DTYPE),
                    preferred_element_type=jnp.float32) + bv3

    scale = 1.0 / jnp.sqrt(jnp.float32(d_head))
    s = jnp.einsum('hqf,hkf->hqk', qh.astype(_MXU_DTYPE), kh.astype(_MXU_DTYPE),
                   preferred_element_type=jnp.float32) * scale
    # TODO(synk): apply key_padding_mask / attention_mask here when provided.
    s = s - jnp.max(s, axis=-1, keepdims=True)
    p = jnp.exp(s)
    p = p * pl.reciprocal(jnp.sum(p, axis=-1, keepdims=True), approx=True)

    o = jnp.einsum('hqk,hkf->hqf', p.astype(_MXU_DTYPE), vh.astype(_MXU_DTYPE),
                   preferred_element_type=jnp.float32)
    # concat over heads followed by W_o  ==  sum over heads of (o_h @ W_o[h]).
    out_h = jnp.einsum('hqf,hfd->hqd', o.astype(_MXU_DTYPE), wo3.astype(_MXU_DTYPE),
                       preferred_element_type=jnp.float32)
    return jnp.sum(out_h, axis=0) + bo


# ------------------------------ fused kernel -------------------------------- #

def _decoder_block_kernel(
        dec_ref, enc_ref,
        # self-attention (head-split weights) + its LayerNorm
        s_wq, s_bq, s_wk, s_bk, s_wv, s_bv, s_wo, s_bo, ln1_g, ln1_b,
        # cross-attention (head-split weights) + its LayerNorm
        c_wq, c_bq, c_wk, c_bk, c_wv, c_bv, c_wo, c_bo, ln2_g, ln2_b,
        # feed-forward + its LayerNorm
        f_w1, f_b1, f_w2, f_b2, ln3_g, ln3_b,
        out_ref, *, num_heads):
    dec = dec_ref[0].astype(jnp.float32)   # [S_dec, D]
    enc = enc_ref[0].astype(jnp.float32)   # [S_enc, D]

    # --- self-attention sublayer: x = dec + LN(selfMHA(dec, dec, dec)) ---
    attn = _mha(dec, dec, s_wq[...], s_bq[...], s_wk[...], s_bk[...],
                s_wv[...], s_bv[...], s_wo[...], s_bo[...], num_heads)
    x = dec + _layer_norm(attn, ln1_g[...], ln1_b[...])

    # --- cross-attention sublayer: x = x + LN(crossMHA(x, enc, enc)) ---
    attn = _mha(x, enc, c_wq[...], c_bq[...], c_wk[...], c_bk[...],
                c_wv[...], c_bv[...], c_wo[...], c_bo[...], num_heads)
    x = x + _layer_norm(attn, ln2_g[...], ln2_b[...])

    # --- feed-forward sublayer: x = x + LN(FFN(x))  (dropout = identity, eval mode) ---
    h = jnp.maximum(_linear(x, f_w1[...], f_b1[...]), 0.0)
    y = _linear(h, f_w2[...], f_b2[...])
    x = x + _layer_norm(y, ln3_g[...], ln3_b[...])

    out_ref[0] = x.astype(out_ref.dtype)


# ------------------------------ host wrappers -------------------------------- #

def _const_spec(arr):
    """Whole-array block, same block for every grid step (constant index_map)."""
    zeros = (0,) * arr.ndim
    return pl.BlockSpec(arr.shape, lambda b, _z=zeros: _z)


def _split_heads_params(p, num_heads):
    """Pre-split MHA projection weights per head on the host (free, no in-kernel reshapes)."""
    wq, bq, wk, bk, wv, bv, wo, bo = p
    d_model = wq.shape[0]
    d_head = d_model // num_heads

    def split_w(w):     # [D, D] -> [H, D, dh]
        return w.reshape(d_model, num_heads, d_head).transpose(1, 0, 2)

    def split_b(b):     # [1, D] -> [H, 1, dh]
        return b.reshape(num_heads, 1, d_head)

    wo3 = wo.reshape(num_heads, d_head, d_model)   # [H, dh, D]
    return (split_w(wq), split_b(bq), split_w(wk), split_b(bk),
            split_w(wv), split_b(bv), wo3, bo)


def decoder_block(decoder_output, encoder_output, params, num_heads):
    B, S_dec, D = decoder_output.shape
    _, S_enc, _ = encoder_output.shape
    assert D % num_heads == 0, "d_model must be divisible by num_heads"

    flat_weights = (
        *_split_heads_params(params["self_mha"], num_heads), *params["ln_self"],
        *_split_heads_params(params["cross_mha"], num_heads), *params["ln_cross"],
        *params["ffn"], *params["ln_ff"],
    )

    dec_spec = pl.BlockSpec((1, S_dec, D), lambda b: (b, 0, 0))
    enc_spec = pl.BlockSpec((1, S_enc, D), lambda b: (b, 0, 0))
    weight_specs = [_const_spec(w) for w in flat_weights]

    kern = partial(_decoder_block_kernel, num_heads=num_heads)
    return pl.pallas_call(
        kern,
        out_shape=jax.ShapeDtypeStruct((B, S_dec, D), decoder_output.dtype),
        grid=(B,),
        in_specs=[dec_spec, enc_spec, *weight_specs],
        out_specs=dec_spec,
        compiler_params=pltpu.CompilerParams(
            dimension_semantics=("parallel",)),   # shard batch across v7x's 2 TensorCores
    )(decoder_output, encoder_output, *flat_weights)


# ---------------------------- param construction ----------------------------- #

def _init_linear(key, fan_in, fan_out):
    w = jax.random.normal(key, (fan_in, fan_out), jnp.float32) * 0.02
    b = jnp.zeros((1, fan_out), jnp.float32)
    return w, b


def init_params(key, dim, hidden_dim):
    keys = jax.random.split(key, 10)

    def mha_params(k4):
        ks = jax.random.split(k4, 4)
        wq, bq = _init_linear(ks[0], dim, dim)
        wk, bk = _init_linear(ks[1], dim, dim)
        wv, bv = _init_linear(ks[2], dim, dim)
        wo, bo = _init_linear(ks[3], dim, dim)
        return (wq, bq, wk, bk, wv, bv, wo, bo)

    def ln_params():
        return (jnp.ones((1, dim), jnp.float32), jnp.zeros((1, dim), jnp.float32))

    w1, b1 = _init_linear(keys[2], dim, hidden_dim)
    w2, b2 = _init_linear(keys[3], hidden_dim, dim)

    return {
        "self_mha": mha_params(keys[0]),
        "cross_mha": mha_params(keys[1]),
        "ln_self": ln_params(),
        "ln_cross": ln_params(),
        "ln_ff": ln_params(),
        "ffn": (w1, b1, w2, b2),
    }


# ----------------------------------- main ------------------------------------ #

if __name__ == "__main__":
    B, S_DEC, S_ENC, DIM, FF_HIDDEN, HEADS = 2, 8, 8, 32, 64, 4

    key = jax.random.PRNGKey(0)
    k_dec, k_enc, k_par = jax.random.split(key, 3)
    decoder_output = jax.random.normal(k_dec, (B, S_DEC, DIM), jnp.float32)
    encoder_output = jax.random.normal(k_enc, (B, S_ENC, DIM), jnp.float32)
    params = init_params(k_par, DIM, FF_HIDDEN)

    out = decoder_block(decoder_output, encoder_output, params, HEADS)
    out = jax.block_until_ready(out)

    assert out.shape == (B, S_DEC, DIM) and bool(jnp.all(jnp.isfinite(out)))
    print("KERNEL_OK")
</pallas_src>

<mosaic_0001>
module attributes {stable_mosaic.version = 11 : i64} {
  func.func @_decoder_block_kernel(%arg0: i32, %arg1: memref<1x8x32xf32, #tpu.memory_space<vmem>>, %arg2: memref<1x8x32xf32, #tpu.memory_space<vmem>>, %arg3: memref<4x32x8xf32, #tpu.memory_space<vmem>>, %arg4: memref<4x1x8xf32, #tpu.memory_space<vmem>>, %arg5: memref<4x32x8xf32, #tpu.memory_space<vmem>>, %arg6: memref<4x1x8xf32, #tpu.memory_space<vmem>>, %arg7: memref<4x32x8xf32, #tpu.memory_space<vmem>>, %arg8: memref<4x1x8xf32, #tpu.memory_space<vmem>>, %arg9: memref<4x8x32xf32, #tpu.memory_space<vmem>>, %arg10: memref<1x32xf32, #tpu.memory_space<vmem>>, %arg11: memref<1x32xf32, #tpu.memory_space<vmem>>, %arg12: memref<1x32xf32, #tpu.memory_space<vmem>>, %arg13: memref<4x32x8xf32, #tpu.memory_space<vmem>>, %arg14: memref<4x1x8xf32, #tpu.memory_space<vmem>>, %arg15: memref<4x32x8xf32, #tpu.memory_space<vmem>>, %arg16: memref<4x1x8xf32, #tpu.memory_space<vmem>>, %arg17: memref<4x32x8xf32, #tpu.memory_space<vmem>>, %arg18: memref<4x1x8xf32, #tpu.memory_space<vmem>>, %arg19: memref<4x8x32xf32, #tpu.memory_space<vmem>>, %arg20: memref<1x32xf32, #tpu.memory_space<vmem>>, %arg21: memref<1x32xf32, #tpu.memory_space<vmem>>, %arg22: memref<1x32xf32, #tpu.memory_space<vmem>>, %arg23: memref<32x64xf32, #tpu.memory_space<vmem>>, %arg24: memref<1x64xf32, #tpu.memory_space<vmem>>, %arg25: memref<64x32xf32, #tpu.memory_space<vmem>>, %arg26: memref<1x32xf32, #tpu.memory_space<vmem>>, %arg27: memref<1x32xf32, #tpu.memory_space<vmem>>, %arg28: memref<1x32xf32, #tpu.memory_space<vmem>>, %arg29: memref<1x8x32xf32, #tpu.memory_space<vmem>>) attributes {dimension_semantics = [#tpu.dimension_semantics<parallel>], iteration_bounds = array<i64: 2>, scalar_prefetch = 0 : i64, scratch_operands = 0 : i64, tpu.core_type = #tpu.core_type<tc>, window_params = [{transform_indices = @transform_0, window_bounds = array<i64: 1, 8, 32>}, {transform_indices = @transform_1, window_bounds = array<i64: 1, 8, 32>}, {pipeline_mode = #tpu.pipeline_mode<synchronous>, transform_indices = @transform_2, window_bounds = array<i64: 4, 32, 8>}, {pipeline_mode = #tpu.pipeline_mode<synchronous>, transform_indices = @transform_3, window_bounds = array<i64: 4, 1, 8>}, {pipeline_mode = #tpu.pipeline_mode<synchronous>, transform_indices = @transform_4, window_bounds = array<i64: 4, 32, 8>}, {pipeline_mode = #tpu.pipeline_mode<synchronous>, transform_indices = @transform_5, window_bounds = array<i64: 4, 1, 8>}, {pipeline_mode = #tpu.pipeline_mode<synchronous>, transform_indices = @transform_6, window_bounds = array<i64: 4, 32, 8>}, {pipeline_mode = #tpu.pipeline_mode<synchronous>, transform_indices = @transform_7, window_bounds = array<i64: 4, 1, 8>}, {pipeline_mode = #tpu.pipeline_mode<synchronous>, transform_indices = @transform_8, window_bounds = array<i64: 4, 8, 32>}, {pipeline_mode = #tpu.pipeline_mode<synchronous>, transform_indices = @transform_9, window_bounds = array<i64: 1, 32>}, {pipeline_mode = #tpu.pipeline_mode<synchronous>, transform_indices = @transform_10, window_bounds = array<i64: 1, 32>}, {pipeline_mode = #tpu.pipeline_mode<synchronous>, transform_indices = @transform_11, window_bounds = array<i64: 1, 32>}, {pipeline_mode = #tpu.pipeline_mode<synchronous>, transform_indices = @transform_12, window_bounds = array<i64: 4, 32, 8>}, {pipeline_mode = #tpu.pipeline_mode<synchronous>, transform_indices = @transform_13, window_bounds = array<i64: 4, 1, 8>}, {pipeline_mode = #tpu.pipeline_mode<synchronous>, transform_indices = @transform_14, window_bounds = array<i64: 4, 32, 8>}, {pipeline_mode = #tpu.pipeline_mode<synchronous>, transform_indices = @transform_15, window_bounds = array<i64: 4, 1, 8>}, {pipeline_mode = #tpu.pipeline_mode<synchronous>, transform_indices = @transform_16, window_bounds = array<i64: 4, 32, 8>}, {pipeline_mode = #tpu.pipeline_mode<synchronous>, transform_indices = @transform_17, window_bounds = array<i64: 4, 1, 8>}, {pipeline_mode = #tpu.pipeline_mode<synchronous>, transform_indices = @transform_18, window_bounds = array<i64: 4, 8, 32>}, {pipeline_mode = #tpu.pipeline_mode<synchronous>, transform_indices = @transform_19, window_bounds = array<i64: 1, 32>}, {pipeline_mode = #tpu.pipeline_mode<synchronous>, transform_indices = @transform_20, window_bounds = array<i64: 1, 32>}, {pipeline_mode = #tpu.pipeline_mode<synchronous>, transform_indices = @transform_21, window_bounds = array<i64: 1, 32>}, {pipeline_mode = #tpu.pipeline_mode<synchronous>, transform_indices = @transform_22, window_bounds = array<i64: 32, 64>}, {pipeline_mode = #tpu.pipeline_mode<synchronous>, transform_indices = @transform_23, window_bounds = array<i64: 1, 64>}, {pipeline_mode = #tpu.pipeline_mode<synchronous>, transform_indices = @transform_24, window_bounds = array<i64: 64, 32>}, {pipeline_mode = #tpu.pipeline_mode<synchronous>, transform_indices = @transform_25, window_bounds = array<i64: 1, 32>}, {pipeline_mode = #tpu.pipeline_mode<synchronous>, transform_indices = @transform_26, window_bounds = array<i64: 1, 32>}, {pipeline_mode = #tpu.pipeline_mode<synchronous>, transform_indices = @transform_27, window_bounds = array<i64: 1, 32>}, {transform_indices = @transform_28, window_bounds = array<i64: 1, 8, 32>}]} {
    %c0 = arith.constant 0 : index
    %c0_0 = arith.constant 0 : index
    %c0_1 = arith.constant 0 : index
    %0 = vector.load %arg1[%c0, %c0_0, %c0_1] : memref<1x8x32xf32, #tpu.memory_space<vmem>>, vector<1x8x32xf32>
    %1 = vector.shape_cast %0 : vector<1x8x32xf32> to vector<8x32xf32>
    %c0_2 = arith.constant 0 : index
    %c0_3 = arith.constant 0 : index
    %c0_4 = arith.constant 0 : index
    %2 = vector.load %arg2[%c0_2, %c0_3, %c0_4] : memref<1x8x32xf32, #tpu.memory_space<vmem>>, vector<1x8x32xf32>
    %3 = vector.shape_cast %2 : vector<1x8x32xf32> to vector<8x32xf32>
    %c0_5 = arith.constant 0 : index
    %c0_6 = arith.constant 0 : index
    %c0_7 = arith.constant 0 : index
    %4 = vector.load %arg3[%c0_5, %c0_6, %c0_7] : memref<4x32x8xf32, #tpu.memory_space<vmem>>, vector<4x32x8xf32>
    %c0_8 = arith.constant 0 : index
    %c0_9 = arith.constant 0 : index
    %c0_10 = arith.constant 0 : index
    %5 = vector.load %arg4[%c0_8, %c0_9, %c0_10] : memref<4x1x8xf32, #tpu.memory_space<vmem>>, vector<4x1x8xf32>
    %c0_11 = arith.constant 0 : index
    %c0_12 = arith.constant 0 : index
    %c0_13 = arith.constant 0 : index
    %6 = vector.load %arg5[%c0_11, %c0_12, %c0_13] : memref<4x32x8xf32, #tpu.memory_space<vmem>>, vector<4x32x8xf32>
    %c0_14 = arith.constant 0 : index
    %c0_15 = arith.constant 0 : index
    %c0_16 = arith.constant 0 : index
    %7 = vector.load %arg6[%c0_14, %c0_15, %c0_16] : memref<4x1x8xf32, #tpu.memory_space<vmem>>, vector<4x1x8xf32>
    %c0_17 = arith.constant 0 : index
    %c0_18 = arith.constant 0 : index
    %c0_19 = arith.constant 0 : index
    %8 = vector.load %arg7[%c0_17, %c0_18, %c0_19] : memref<4x32x8xf32, #tpu.memory_space<vmem>>, vector<4x32x8xf32>
    %c0_20 = arith.constant 0 : index
    %c0_21 = arith.constant 0 : index
    %c0_22 = arith.constant 0 : index
    %9 = vector.load %arg8[%c0_20, %c0_21, %c0_22] : memref<4x1x8xf32, #tpu.memory_space<vmem>>, vector<4x1x8xf32>
    %c0_23 = arith.constant 0 : index
    %c0_24 = arith.constant 0 : index
    %c0_25 = arith.constant 0 : index
    %10 = vector.load %arg9[%c0_23, %c0_24, %c0_25] : memref<4x8x32xf32, #tpu.memory_space<vmem>>, vector<4x8x32xf32>
    %c0_26 = arith.constant 0 : index
    %c0_27 = arith.constant 0 : index
    %11 = vector.load %arg10[%c0_26, %c0_27] : memref<1x32xf32, #tpu.memory_space<vmem>>, vector<1x32xf32>
    %12 = arith.truncf %1 : vector<8x32xf32> to vector<8x32xbf16>
    %13 = vector.shape_cast %12 : vector<8x32xbf16> to vector<1x8x32xbf16>
    %14 = vector.broadcast %13 : vector<1x8x32xbf16> to vector<4x8x32xbf16>
    %15 = arith.truncf %1 : vector<8x32xf32> to vector<8x32xbf16>
    %16 = vector.shape_cast %15 : vector<8x32xbf16> to vector<1x8x32xbf16>
    %17 = vector.broadcast %16 : vector<1x8x32xbf16> to vector<4x8x32xbf16>
    %18 = arith.truncf %4 : vector<4x32x8xf32> to vector<4x32x8xbf16>
    "tpu.trace_start"() <{level = 10 : i32, message = "hsd,hdf->hsf"}> : () -> ()
    %cst = arith.constant dense<0.000000e+00> : vector<4x8x8xf32>
    %19 = tpu.matmul %14, %18, %cst {dimension_numbers = #tpu.dot_dimension_numbers<[2], [1], [1], [2], [0, 0, 0, 1, 1, 2], [0], [0]>} : vector<4x8x32xbf16>, vector<4x32x8xbf16>, vector<4x8x8xf32> -> vector<4x8x8xf32>
    "tpu.trace_stop"() : () -> ()
    %20 = vector.broadcast %5 : vector<4x1x8xf32> to vector<4x8x8xf32>
    %21 = arith.addf %19, %20 : vector<4x8x8xf32>
    %22 = arith.truncf %6 : vector<4x32x8xf32> to vector<4x32x8xbf16>
    "tpu.trace_start"() <{level = 10 : i32, message = "hsd,hdf->hsf"}> : () -> ()
    %cst_28 = arith.constant dense<0.000000e+00> : vector<4x8x8xf32>
    %23 = tpu.matmul %17, %22, %cst_28 {dimension_numbers = #tpu.dot_dimension_numbers<[2], [1], [1], [2], [0, 0, 0, 1, 1, 2], [0], [0]>} : vector<4x8x32xbf16>, vector<4x32x8xbf16>, vector<4x8x8xf32> -> vector<4x8x8xf32>
    "tpu.trace_stop"() : () -> ()
    %24 = vector.broadcast %7 : vector<4x1x8xf32> to vector<4x8x8xf32>
    %25 = arith.addf %23, %24 : vector<4x8x8xf32>
    %26 = arith.truncf %8 : vector<4x32x8xf32> to vector<4x32x8xbf16>
    "tpu.trace_start"() <{level = 10 : i32, message = "hsd,hdf->hsf"}> : () -> ()
    %cst_29 = arith.constant dense<0.000000e+00> : vector<4x8x8xf32>
    %27 = tpu.matmul %17, %26, %cst_29 {dimension_numbers = #tpu.dot_dimension_numbers<[2], [1], [1], [2], [0, 0, 0, 1, 1, 2], [0], [0]>} : vector<4x8x32xbf16>, vector<4x32x8xbf16>, vector<4x8x8xf32> -> vector<4x8x8xf32>
    "tpu.trace_stop"() : () -> ()
    %28 = vector.broadcast %9 : vector<4x1x8xf32> to vector<4x8x8xf32>
    %29 = arith.addf %27, %28 : vector<4x8x8xf32>
    %cst_30 = arith.constant 8.000000e+00 : f32
    %30 = math.sqrt %cst_30 : f32
    %cst_31 = arith.constant 1.000000e+00 : f32
    %31 = arith.divf %cst_31, %30 : f32
    %32 = arith.truncf %21 : vector<4x8x8xf32> to vector<4x8x8xbf16>
    %33 = arith.truncf %25 : vector<4x8x8xf32> to vector<4x8x8xbf16>
    "tpu.trace_start"() <{level = 10 : i32, message = "hqf,hkf->hqk"}> : () -> ()
    %cst_32 = arith.constant dense<0.000000e+00> : vector<4x8x8xf32>
    %34 = tpu.matmul %32, %33, %cst_32 {dimension_numbers = #tpu.dot_dimension_numbers<[2], [2], [1], [1], [0, 0, 0, 1, 1, 1], [0], [0]>} : vector<4x8x8xbf16>, vector<4x8x8xbf16>, vector<4x8x8xf32> -> vector<4x8x8xf32>
    "tpu.trace_stop"() : () -> ()
    %35 = vector.broadcast %31 : f32 to vector<4x8x8xf32>
    %36 = arith.mulf %34, %35 : vector<4x8x8xf32>
    %cst_33 = arith.constant dense<0xFF800000> : vector<4x8xf32>
    %37 = vector.multi_reduction <maximumf>, %36, %cst_33 [2] : vector<4x8x8xf32> to vector<4x8xf32>
    %38 = vector.shape_cast %37 : vector<4x8xf32> to vector<4x8x1xf32>
    %39 = vector.broadcast %38 : vector<4x8x1xf32> to vector<4x8x8xf32>
    %40 = arith.subf %36, %39 : vector<4x8x8xf32>
    %41 = math.exp %40 : vector<4x8x8xf32>
    %cst_34 = arith.constant dense<0.000000e+00> : vector<4x8xf32>
    %42 = vector.multi_reduction <add>, %41, %cst_34 [2] : vector<4x8x8xf32> to vector<4x8xf32>
    %43 = vector.shape_cast %42 : vector<4x8xf32> to vector<4x8x1xf32>
    %44 = tpu.reciprocal %43 {approx = true} : vector<4x8x1xf32> -> vector<4x8x1xf32>
    %45 = vector.broadcast %44 : vector<4x8x1xf32> to vector<4x8x8xf32>
    %46 = arith.mulf %41, %45 : vector<4x8x8xf32>
    %47 = arith.truncf %46 : vector<4x8x8xf32> to vector<4x8x8xbf16>
    %48 = arith.truncf %29 : vector<4x8x8xf32> to vector<4x8x8xbf16>
    "tpu.trace_start"() <{level = 10 : i32, message = "hqk,hkf->hqf"}> : () -> ()
    %cst_35 = arith.constant dense<0.000000e+00> : vector<4x8x8xf32>
    %49 = tpu.matmul %47, %48, %cst_35 {dimension_numbers = #tpu.dot_dimension_numbers<[2], [1], [1], [2], [0, 0, 0, 1, 1, 2], [0], [0]>} : vector<4x8x8xbf16>, vector<4x8x8xbf16>, vector<4x8x8xf32> -> vector<4x8x8xf32>
    "tpu.trace_stop"() : () -> ()
    %50 = arith.truncf %49 : vector<4x8x8xf32> to vector<4x8x8xbf16>
    %51 = arith.truncf %10 : vector<4x8x32xf32> to vector<4x8x32xbf16>
    "tpu.trace_start"() <{level = 10 : i32, message = "hqf,hfd->hqd"}> : () -> ()
    %cst_36 = arith.constant dense<0.000000e+00> : vector<4x8x32xf32>
    %52 = tpu.matmul %50, %51, %cst_36 {dimension_numbers = #tpu.dot_dimension_numbers<[2], [1], [1], [2], [0, 0, 0, 1, 1, 2], [0], [0]>} : vector<4x8x8xbf16>, vector<4x8x32xbf16>, vector<4x8x32xf32> -> vector<4x8x32xf32>
    "tpu.trace_stop"() : () -> ()
    %cst_37 = arith.constant dense<0.000000e+00> : vector<8x32xf32>
    %53 = vector.multi_reduction <add>, %52, %cst_37 [0] : vector<4x8x32xf32> to vector<8x32xf32>
    %54 = vector.broadcast %11 : vector<1x32xf32> to vector<8x32xf32>
    %55 = arith.addf %53, %54 : vector<8x32xf32>
    %c0_38 = arith.constant 0 : index
    %c0_39 = arith.constant 0 : index
    %56 = vector.load %arg11[%c0_38, %c0_39] : memref<1x32xf32, #tpu.memory_space<vmem>>, vector<1x32xf32>
    %c0_40 = arith.constant 0 : index
    %c0_41 = arith.constant 0 : index
    %57 = vector.load %arg12[%c0_40, %c0_41] : memref<1x32xf32, #tpu.memory_space<vmem>>, vector<1x32xf32>
    %cst_42 = arith.constant dense<0.000000e+00> : vector<8xf32>
    %58 = vector.multi_reduction <add>, %55, %cst_42 [1] : vector<8x32xf32> to vector<8xf32>
    %59 = vector.shape_cast %58 : vector<8xf32> to vector<8x1xf32>
    %cst_43 = arith.constant 3.200000e+01 : f32
    %60 = vector.broadcast %cst_43 : f32 to vector<8x1xf32>
    %61 = arith.divf %59, %60 : vector<8x1xf32>
    %62 = vector.broadcast %61 : vector<8x1xf32> to vector<8x32xf32>
    %63 = arith.subf %55, %62 : vector<8x32xf32>
    %64 = arith.mulf %63, %63 : vector<8x32xf32>
    %cst_44 = arith.constant dense<0.000000e+00> : vector<8xf32>
    %65 = vector.multi_reduction <add>, %64, %cst_44 [1] : vector<8x32xf32> to vector<8xf32>
    %66 = vector.shape_cast %65 : vector<8xf32> to vector<8x1xf32>
    %cst_45 = arith.constant 3.200000e+01 : f32
    %67 = vector.broadcast %cst_45 : f32 to vector<8x1xf32>
    %68 = arith.divf %66, %67 : vector<8x1xf32>
    %69 = vector.broadcast %61 : vector<8x1xf32> to vector<8x32xf32>
    %70 = arith.subf %55, %69 : vector<8x32xf32>
    %cst_46 = arith.constant 9.99999974E-6 : f32
    %71 = vector.broadcast %cst_46 : f32 to vector<8x1xf32>
    %72 = arith.addf %68, %71 : vector<8x1xf32>
    %73 = math.rsqrt %72 : vector<8x1xf32>
    %74 = vector.broadcast %73 : vector<8x1xf32> to vector<8x32xf32>
    %75 = arith.mulf %70, %74 : vector<8x32xf32>
    %76 = vector.broadcast %56 : vector<1x32xf32> to vector<8x32xf32>
    %77 = arith.mulf %75, %76 : vector<8x32xf32>
    %78 = vector.broadcast %57 : vector<1x32xf32> to vector<8x32xf32>
    %79 = arith.addf %77, %78 : vector<8x32xf32>
    %80 = arith.addf %1, %79 : vector<8x32xf32>
    %c0_47 = arith.constant 0 : index
    %c0_48 = arith.constant 0 : index
    %c0_49 = arith.constant 0 : index
    %81 = vector.load %arg13[%c0_47, %c0_48, %c0_49] : memref<4x32x8xf32, #tpu.memory_space<vmem>>, vector<4x32x8xf32>
    %c0_50 = arith.constant 0 : index
    %c0_51 = arith.constant 0 : index
    %c0_52 = arith.constant 0 : index
    %82 = vector.load %arg14[%c0_50, %c0_51, %c0_52] : memref<4x1x8xf32, #tpu.memory_space<vmem>>, vector<4x1x8xf32>
    %c0_53 = arith.constant 0 : index
    %c0_54 = arith.constant 0 : index
    %c0_55 = arith.constant 0 : index
    %83 = vector.load %arg15[%c0_53, %c0_54, %c0_55] : memref<4x32x8xf32, #tpu.memory_space<vmem>>, vector<4x32x8xf32>
    %c0_56 = arith.constant 0 : index
    %c0_57 = arith.constant 0 : index
    %c0_58 = arith.constant 0 : index
    %84 = vector.load %arg16[%c0_56, %c0_57, %c0_58] : memref<4x1x8xf32, #tpu.memory_space<vmem>>, vector<4x1x8xf32>
    %c0_59 = arith.constant 0 : index
    %c0_60 = arith.constant 0 : index
    %c0_61 = arith.constant 0 : index
    %85 = vector.load %arg17[%c0_59, %c0_60, %c0_61] : memref<4x32x8xf32, #tpu.memory_space<vmem>>, vector<4x32x8xf32>
    %c0_62 = arith.constant 0 : index
    %c0_63 = arith.constant 0 : index
    %c0_64 = arith.constant 0 : index
    %86 = vector.load %arg18[%c0_62, %c0_63, %c0_64] : memref<4x1x8xf32, #tpu.memory_space<vmem>>, vector<4x1x8xf32>
    %c0_65 = arith.constant 0 : index
    %c0_66 = arith.constant 0 : index
    %c0_67 = arith.constant 0 : index
    %87 = vector.load %arg19[%c0_65, %c0_66, %c0_67] : memref<4x8x32xf32, #tpu.memory_space<vmem>>, vector<4x8x32xf32>
    %c0_68 = arith.constant 0 : index
    %c0_69 = arith.constant 0 : index
    %88 = vector.load %arg20[%c0_68, %c0_69] : memref<1x32xf32, #tpu.memory_space<vmem>>, vector<1x32xf32>
    %89 = arith.truncf %80 : vector<8x32xf32> to vector<8x32xbf16>
    %90 = vector.shape_cast %89 : vector<8x32xbf16> to vector<1x8x32xbf16>
    %91 = vector.broadcast %90 : vector<1x8x32xbf16> to vector<4x8x32xbf16>
    %92 = arith.truncf %3 : vector<8x32xf32> to vector<8x32xbf16>
    %93 = vector.shape_cast %92 : vector<8x32xbf16> to vector<1x8x32xbf16>
    %94 = vector.broadcast %93 : vector<1x8x32xbf16> to vector<4x8x32xbf16>
    %95 = arith.truncf %81 : vector<4x32x8xf32> to vector<4x32x8xbf16>
    "tpu.trace_start"() <{level = 10 : i32, message = "hsd,hdf->hsf"}> : () -> ()
    %cst_70 = arith.constant dense<0.000000e+00> : vector<4x8x8xf32>
    %96 = tpu.matmul %91, %95, %cst_70 {dimension_numbers = #tpu.dot_dimension_numbers<[2], [1], [1], [2], [0, 0, 0, 1, 1, 2], [0], [0]>} : vector<4x8x32xbf16>, vector<4x32x8xbf16>, vector<4x8x8xf32> -> vector<4x8x8xf32>
    "tpu.trace_stop"() : () -> ()
    %97 = vector.broadcast %82 : vector<4x1x8xf32> to vector<4x8x8xf32>
    %98 = arith.addf %96, %97 : vector<4x8x8xf32>
    %99 = arith.truncf %83 : vector<4x32x8xf32> to vector<4x32x8xbf16>
    "tpu.trace_start"() <{level = 10 : i32, message = "hsd,hdf->hsf"}> : () -> ()
    %cst_71 = arith.constant dense<0.000000e+00> : vector<4x8x8xf32>
    %100 = tpu.matmul %94, %99, %cst_71 {dimension_numbers = #tpu.dot_dimension_numbers<[2], [1], [1], [2], [0, 0, 0, 1, 1, 2], [0], [0]>} : vector<4x8x32xbf16>, vector<4x32x8xbf16>, vector<4x8x8xf32> -> vector<4x8x8xf32>
    "tpu.trace_stop"() : () -> ()
    %101 = vector.broadcast %84 : vector<4x1x8xf32> to vector<4x8x8xf32>
    %102 = arith.addf %100, %101 : vector<4x8x8xf32>
    %103 = arith.truncf %85 : vector<4x32x8xf32> to vector<4x32x8xbf16>
    "tpu.trace_start"() <{level = 10 : i32, message = "hsd,hdf->hsf"}> : () -> ()
    %cst_72 = arith.constant dense<0.000000e+00> : vector<4x8x8xf32>
    %104 = tpu.matmul %94, %103, %cst_72 {dimension_numbers = #tpu.dot_dimension_numbers<[2], [1], [1], [2], [0, 0, 0, 1, 1, 2], [0], [0]>} : vector<4x8x32xbf16>, vector<4x32x8xbf16>, vector<4x8x8xf32> -> vector<4x8x8xf32>
    "tpu.trace_stop"() : () -> ()
    %105 = vector.broadcast %86 : vector<4x1x8xf32> to vector<4x8x8xf32>
    %106 = arith.addf %104, %105 : vector<4x8x8xf32>
    %cst_73 = arith.constant 8.000000e+00 : f32
    %107 = math.sqrt %cst_73 : f32
    %cst_74 = arith.constant 1.000000e+00 : f32
    %108 = arith.divf %cst_74, %107 : f32
    %109 = arith.truncf %98 : vector<4x8x8xf32> to vector<4x8x8xbf16>
    %110 = arith.truncf %102 : vector<4x8x8xf32> to vector<4x8x8xbf16>
    "tpu.trace_start"() <{level = 10 : i32, message = "hqf,hkf->hqk"}> : () -> ()
    %cst_75 = arith.constant dense<0.000000e+00> : vector<4x8x8xf32>
    %111 = tpu.matmul %109, %110, %cst_75 {dimension_numbers = #tpu.dot_dimension_numbers<[2], [2], [1], [1], [0, 0, 0, 1, 1, 1], [0], [0]>} : vector<4x8x8xbf16>, vector<4x8x8xbf16>, vector<4x8x8xf32> -> vector<4x8x8xf32>
    "tpu.trace_stop"() : () -> ()
    %112 = vector.broadcast %108 : f32 to vector<4x8x8xf32>
    %113 = arith.mulf %111, %112 : vector<4x8x8xf32>
    %cst_76 = arith.constant dense<0xFF800000> : vector<4x8xf32>
    %114 = vector.multi_reduction <maximumf>, %113, %cst_76 [2] : vector<4x8x8xf32> to vector<4x8xf32>
    %115 = vector.shape_cast %114 : vector<4x8xf32> to vector<4x8x1xf32>
    %116 = vector.broadcast %115 : vector<4x8x1xf32> to vector<4x8x8xf32>
    %117 = arith.subf %113, %116 : vector<4x8x8xf32>
    %118 = math.exp %117 : vector<4x8x8xf32>
    %cst_77 = arith.constant dense<0.000000e+00> : vector<4x8xf32>
    %119 = vector.multi_reduction <add>, %118, %cst_77 [2] : vector<4x8x8xf32> to vector<4x8xf32>
    %120 = vector.shape_cast %119 : vector<4x8xf32> to vector<4x8x1xf32>
    %121 = tpu.reciprocal %120 {approx = true} : vector<4x8x1xf32> -> vector<4x8x1xf32>
    %122 = vector.broadcast %121 : vector<4x8x1xf32> to vector<4x8x8xf32>
    %123 = arith.mulf %118, %122 : vector<4x8x8xf32>
    %124 = arith.truncf %123 : vector<4x8x8xf32> to vector<4x8x8xbf16>
    %125 = arith.truncf %106 : vector<4x8x8xf32> to vector<4x8x8xbf16>
    "tpu.trace_start"() <{level = 10 : i32, message = "hqk,hkf->hqf"}> : () -> ()
    %cst_78 = arith.constant dense<0.000000e+00> : vector<4x8x8xf32>
    %126 = tpu.matmul %124, %125, %cst_78 {dimension_numbers = #tpu.dot_dimension_numbers<[2], [1], [1], [2], [0, 0, 0, 1, 1, 2], [0], [0]>} : vector<4x8x8xbf16>, vector<4x8x8xbf16>, vector<4x8x8xf32> -> vector<4x8x8xf32>
    "tpu.trace_stop"() : () -> ()
    %127 = arith.truncf %126 : vector<4x8x8xf32> to vector<4x8x8xbf16>
    %128 = arith.truncf %87 : vector<4x8x32xf32> to vector<4x8x32xbf16>
    "tpu.trace_start"() <{level = 10 : i32, message = "hqf,hfd->hqd"}> : () -> ()
    %cst_79 = arith.constant dense<0.000000e+00> : vector<4x8x32xf32>
    %129 = tpu.matmul %127, %128, %cst_79 {dimension_numbers = #tpu.dot_dimension_numbers<[2], [1], [1], [2], [0, 0, 0, 1, 1, 2], [0], [0]>} : vector<4x8x8xbf16>, vector<4x8x32xbf16>, vector<4x8x32xf32> -> vector<4x8x32xf32>
    "tpu.trace_stop"() : () -> ()
    %cst_80 = arith.constant dense<0.000000e+00> : vector<8x32xf32>
    %130 = vector.multi_reduction <add>, %129, %cst_80 [0] : vector<4x8x32xf32> to vector<8x32xf32>
    %131 = vector.broadcast %88 : vector<1x32xf32> to vector<8x32xf32>
    %132 = arith.addf %130, %131 : vector<8x32xf32>
    %c0_81 = arith.constant 0 : index
    %c0_82 = arith.constant 0 : index
    %133 = vector.load %arg21[%c0_81, %c0_82] : memref<1x32xf32, #tpu.memory_space<vmem>>, vector<1x32xf32>
    %c0_83 = arith.constant 0 : index
    %c0_84 = arith.constant 0 : index
    %134 = vector.load %arg22[%c0_83, %c0_84] : memref<1x32xf32, #tpu.memory_space<vmem>>, vector<1x32xf32>
    %cst_85 = arith.constant dense<0.000000e+00> : vector<8xf32>
    %135 = vector.multi_reduction <add>, %132, %cst_85 [1] : vector<8x32xf32> to vector<8xf32>
    %136 = vector.shape_cast %135 : vector<8xf32> to vector<8x1xf32>
    %cst_86 = arith.constant 3.200000e+01 : f32
    %137 = vector.broadcast %cst_86 : f32 to vector<8x1xf32>
    %138 = arith.divf %136, %137 : vector<8x1xf32>
    %139 = vector.broadcast %138 : vector<8x1xf32> to vector<8x32xf32>
    %140 = arith.subf %132, %139 : vector<8x32xf32>
    %141 = arith.mulf %140, %140 : vector<8x32xf32>
    %cst_87 = arith.constant dense<0.000000e+00> : vector<8xf32>
    %142 = vector.multi_reduction <add>, %141, %cst_87 [1] : vector<8x32xf32> to vector<8xf32>
    %143 = vector.shape_cast %142 : vector<8xf32> to vector<8x1xf32>
    %cst_88 = arith.constant 3.200000e+01 : f32
    %144 = vector.broadcast %cst_88 : f32 to vector<8x1xf32>
    %145 = arith.divf %143, %144 : vector<8x1xf32>
    %146 = vector.broadcast %138 : vector<8x1xf32> to vector<8x32xf32>
    %147 = arith.subf %132, %146 : vector<8x32xf32>
    %cst_89 = arith.constant 9.99999974E-6 : f32
    %148 = vector.broadcast %cst_89 : f32 to vector<8x1xf32>
    %149 = arith.addf %145, %148 : vector<8x1xf32>
    %150 = math.rsqrt %149 : vector<8x1xf32>
    %151 = vector.broadcast %150 : vector<8x1xf32> to vector<8x32xf32>
    %152 = arith.mulf %147, %151 : vector<8x32xf32>
    %153 = vector.broadcast %133 : vector<1x32xf32> to vector<8x32xf32>
    %154 = arith.mulf %152, %153 : vector<8x32xf32>
    %155 = vector.broadcast %134 : vector<1x32xf32> to vector<8x32xf32>
    %156 = arith.addf %154, %155 : vector<8x32xf32>
    %157 = arith.addf %80, %156 : vector<8x32xf32>
    %c0_90 = arith.constant 0 : index
    %c0_91 = arith.constant 0 : index
    %158 = vector.load %arg23[%c0_90, %c0_91] : memref<32x64xf32, #tpu.memory_space<vmem>>, vector<32x64xf32>
    %c0_92 = arith.constant 0 : index
    %c0_93 = arith.constant 0 : index
    %159 = vector.load %arg24[%c0_92, %c0_93] : memref<1x64xf32, #tpu.memory_space<vmem>>, vector<1x64xf32>
    %160 = arith.truncf %157 : vector<8x32xf32> to vector<8x32xbf16>
    %161 = arith.truncf %158 : vector<32x64xf32> to vector<32x64xbf16>
    %cst_94 = arith.constant dense<0.000000e+00> : vector<8x64xf32>
    %162 = tpu.matmul %160, %161, %cst_94 {dimension_numbers = #tpu.dot_dimension_numbers<[1], [0], [0], [1], [0, 0, 1, 1], [], []>} : vector<8x32xbf16>, vector<32x64xbf16>, vector<8x64xf32> -> vector<8x64xf32>
    %163 = vector.broadcast %159 : vector<1x64xf32> to vector<8x64xf32>
    %164 = arith.addf %162, %163 : vector<8x64xf32>
    %cst_95 = arith.constant 0.000000e+00 : f32
    %165 = vector.broadcast %cst_95 : f32 to vector<8x64xf32>
    %166 = arith.maximumf %164, %165 : vector<8x64xf32>
    %c0_96 = arith.constant 0 : index
    %c0_97 = arith.constant 0 : index
    %167 = vector.load %arg25[%c0_96, %c0_97] : memref<64x32xf32, #tpu.memory_space<vmem>>, vector<64x32xf32>
    %c0_98 = arith.constant 0 : index
    %c0_99 = arith.constant 0 : index
    %168 = vector.load %arg26[%c0_98, %c0_99] : memref<1x32xf32, #tpu.memory_space<vmem>>, vector<1x32xf32>
    %169 = arith.truncf %166 : vector<8x64xf32> to vector<8x64xbf16>
    %170 = arith.truncf %167 : vector<64x32xf32> to vector<64x32xbf16>
    %cst_100 = arith.constant dense<0.000000e+00> : vector<8x32xf32>
    %171 = tpu.matmul %169, %170, %cst_100 {dimension_numbers = #tpu.dot_dimension_numbers<[1], [0], [0], [1], [0, 0, 1, 1], [], []>} : vector<8x64xbf16>, vector<64x32xbf16>, vector<8x32xf32> -> vector<8x32xf32>
    %172 = vector.broadcast %168 : vector<1x32xf32> to vector<8x32xf32>
    %173 = arith.addf %171, %172 : vector<8x32xf32>
    %c0_101 = arith.constant 0 : index
    %c0_102 = arith.constant 0 : index
    %174 = vector.load %arg27[%c0_101, %c0_102] : memref<1x32xf32, #tpu.memory_space<vmem>>, vector<1x32xf32>
    %c0_103 = arith.constant 0 : index
    %c0_104 = arith.constant 0 : index
    %175 = vector.load %arg28[%c0_103, %c0_104] : memref<1x32xf32, #tpu.memory_space<vmem>>, vector<1x32xf32>
    %cst_105 = arith.constant dense<0.000000e+00> : vector<8xf32>
    %176 = vector.multi_reduction <add>, %173, %cst_105 [1] : vector<8x32xf32> to vector<8xf32>
    %177 = vector.shape_cast %176 : vector<8xf32> to vector<8x1xf32>
    %cst_106 = arith.constant 3.200000e+01 : f32
    %178 = vector.broadcast %cst_106 : f32 to vector<8x1xf32>
    %179 = arith.divf %177, %178 : vector<8x1xf32>
    %180 = vector.broadcast %179 : vector<8x1xf32> to vector<8x32xf32>
    %181 = arith.subf %173, %180 : vector<8x32xf32>
    %182 = arith.mulf %181, %181 : vector<8x32xf32>
    %cst_107 = arith.constant dense<0.000000e+00> : vector<8xf32>
    %183 = vector.multi_reduction <add>, %182, %cst_107 [1] : vector<8x32xf32> to vector<8xf32>
    %184 = vector.shape_cast %183 : vector<8xf32> to vector<8x1xf32>
    %cst_108 = arith.constant 3.200000e+01 : f32
    %185 = vector.broadcast %cst_108 : f32 to vector<8x1xf32>
    %186 = arith.divf %184, %185 : vector<8x1xf32>
    %187 = vector.broadcast %179 : vector<8x1xf32> to vector<8x32xf32>
    %188 = arith.subf %173, %187 : vector<8x32xf32>
    %cst_109 = arith.constant 9.99999974E-6 : f32
    %189 = vector.broadcast %cst_109 : f32 to vector<8x1xf32>
    %190 = arith.addf %186, %189 : vector<8x1xf32>
    %191 = math.rsqrt %190 : vector<8x1xf32>
    %192 = vector.broadcast %191 : vector<8x1xf32> to vector<8x32xf32>
    %193 = arith.mulf %188, %192 : vector<8x32xf32>
    %194 = vector.broadcast %174 : vector<1x32xf32> to vector<8x32xf32>
    %195 = arith.mulf %193, %194 : vector<8x32xf32>
    %196 = vector.broadcast %175 : vector<1x32xf32> to vector<8x32xf32>
    %197 = arith.addf %195, %196 : vector<8x32xf32>
    %198 = arith.addf %157, %197 : vector<8x32xf32>
    %c0_110 = arith.constant 0 : index
    %c0_111 = arith.constant 0 : index
    %c0_112 = arith.constant 0 : index
    %199 = vector.load %arg29[%c0_110, %c0_111, %c0_112] : memref<1x8x32xf32, #tpu.memory_space<vmem>>, vector<1x8x32xf32>
    %200 = vector.shape_cast %199 : vector<1x8x32xf32> to vector<8x32xf32>
    %201 = vector.shape_cast %198 : vector<8x32xf32> to vector<1x8x32xf32>
    tpu.vector_store %arg29[%c0_110, %c0_111, %c0_112], %201 {strides = array<i32>} : memref<1x8x32xf32, #tpu.memory_space<vmem>>, vector<1x8x32xf32>,
    return
  }
  func.func @transform_0(%arg0: i32) -> (i32, i32, i32) {
    %c0_i32 = arith.constant 0 : i32
    %c0_i32_0 = arith.constant 0 : i32
    %c0_i32_1 = arith.constant 0 : i32
    return %arg0, %c0_i32, %c0_i32_0 : i32, i32, i32
  }
  func.func @transform_1(%arg0: i32) -> (i32, i32, i32) {
    %c0_i32 = arith.constant 0 : i32
    %c0_i32_0 = arith.constant 0 : i32
    %c0_i32_1 = arith.constant 0 : i32
    return %arg0, %c0_i32, %c0_i32_0 : i32, i32, i32
  }
  func.func @transform_2(%arg0: i32) -> (i32, i32, i32) {
    %c0_i32 = arith.constant 0 : i32
    %c0_i32_0 = arith.constant 0 : i32
    %c0_i32_1 = arith.constant 0 : i32
    %c0_i32_2 = arith.constant 0 : i32
    return %c0_i32, %c0_i32_0, %c0_i32_1 : i32, i32, i32
  }
  func.func @transform_3(%arg0: i32) -> (i32, i32, i32) {
    %c0_i32 = arith.constant 0 : i32
    %c0_i32_0 = arith.constant 0 : i32
    %c0_i32_1 = arith.constant 0 : i32
    %c0_i32_2 = arith.constant 0 : i32
    return %c0_i32, %c0_i32_0, %c0_i32_1 : i32, i32, i32
  }
  func.func @transform_4(%arg0: i32) -> (i32, i32, i32) {
    %c0_i32 = arith.constant 0 : i32
    %c0_i32_0 = arith.constant 0 : i32
    %c0_i32_1 = arith.constant 0 : i32
    %c0_i32_2 = arith.constant 0 : i32
    return %c0_i32, %c0_i32_0, %c0_i32_1 : i32, i32, i32
  }
  func.func @transform_5(%arg0: i32) -> (i32, i32, i32) {
    %c0_i32 = arith.constant 0 : i32
    %c0_i32_0 = arith.constant 0 : i32
    %c0_i32_1 = arith.constant 0 : i32
    %c0_i32_2 = arith.constant 0 : i32
    return %c0_i32, %c0_i32_0, %c0_i32_1 : i32, i32, i32
  }
  func.func @transform_6(%arg0: i32) -> (i32, i32, i32) {
    %c0_i32 = arith.constant 0 : i32
    %c0_i32_0 = arith.constant 0 : i32
    %c0_i32_1 = arith.constant 0 : i32
    %c0_i32_2 = arith.constant 0 : i32
    return %c0_i32, %c0_i32_0, %c0_i32_1 : i32, i32, i32
  }
  func.func @transform_7(%arg0: i32) -> (i32, i32, i32) {
    %c0_i32 = arith.constant 0 : i32
    %c0_i32_0 = arith.constant 0 : i32
    %c0_i32_1 = arith.constant 0 : i32
    %c0_i32_2 = arith.constant 0 : i32
    return %c0_i32, %c0_i32_0, %c0_i32_1 : i32, i32, i32
  }
  func.func @transform_8(%arg0: i32) -> (i32, i32, i32) {
    %c0_i32 = arith.constant 0 : i32
    %c0_i32_0 = arith.constant 0 : i32
    %c0_i32_1 = arith.constant 0 : i32
    %c0_i32_2 = arith.constant 0 : i32
    return %c0_i32, %c0_i32_0, %c0_i32_1 : i32, i32, i32
  }
  func.func @transform_9(%arg0: i32) -> (i32, i32) {
    %c0_i32 = arith.constant 0 : i32
    %c0_i32_0 = arith.constant 0 : i32
    %c0_i32_1 = arith.constant 0 : i32
    return %c0_i32, %c0_i32_0 : i32, i32
  }
  func.func @transform_10(%arg0: i32) -> (i32, i32) {
    %c0_i32 = arith.constant 0 : i32
    %c0_i32_0 = arith.constant 0 : i32
    %c0_i32_1 = arith.constant 0 : i32
    return %c0_i32, %c0_i32_0 : i32, i32
  }
  func.func @transform_11(%arg0: i32) -> (i32, i32) {
    %c0_i32 = arith.constant 0 : i32
    %c0_i32_0 = arith.constant 0 : i32
    %c0_i32_1 = arith.constant 0 : i32
    return %c0_i32, %c0_i32_0 : i32, i32
  }
  func.func @transform_12(%arg0: i32) -> (i32, i32, i32) {
    %c0_i32 = arith.constant 0 : i32
    %c0_i32_0 = arith.constant 0 : i32
    %c0_i32_1 = arith.constant 0 : i32
    %c0_i32_2 = arith.constant 0 : i32
    return %c0_i32, %c0_i32_0, %c0_i32_1 : i32, i32, i32
  }
  func.func @transform_13(%arg0: i32) -> (i32, i32, i32) {
    %c0_i32 = arith.constant 0 : i32
    %c0_i32_0 = arith.constant 0 : i32
    %c0_i32_1 = arith.constant 0 : i32
    %c0_i32_2 = arith.constant 0 : i32
    return %c0_i32, %c0_i32_0, %c0_i32_1 : i32, i32, i32
  }
  func.func @transform_14(%arg0: i32) -> (i32, i32, i32) {
    %c0_i32 = arith.constant 0 : i32
    %c0_i32_0 = arith.constant 0 : i32
    %c0_i32_1 = arith.constant 0 : i32
    %c0_i32_2 = arith.constant 0 : i32
    return %c0_i32, %c0_i32_0, %c0_i32_1 : i32, i32, i32
  }
  func.func @transform_15(%arg0: i32) -> (i32, i32, i32) {
    %c0_i32 = arith.constant 0 : i32
    %c0_i32_0 = arith.constant 0 : i32
    %c0_i32_1 = arith.constant 0 : i32
    %c0_i32_2 = arith.constant 0 : i32
    return %c0_i32, %c0_i32_0, %c0_i32_1 : i32, i32, i32
  }
  func.func @transform_16(%arg0: i32) -> (i32, i32, i32) {
    %c0_i32 = arith.constant 0 : i32
    %c0_i32_0 = arith.constant 0 : i32
    %c0_i32_1 = arith.constant 0 : i32
    %c0_i32_2 = arith.constant 0 : i32
    return %c0_i32, %c0_i32_0, %c0_i32_1 : i32, i32, i32
  }
  func.func @transform_17(%arg0: i32) -> (i32, i32, i32) {
    %c0_i32 = arith.constant 0 : i32
    %c0_i32_0 = arith.constant 0 : i32
    %c0_i32_1 = arith.constant 0 : i32
    %c0_i32_2 = arith.constant 0 : i32
    return %c0_i32, %c0_i32_0, %c0_i32_1 : i32, i32, i32
  }
  func.func @transform_18(%arg0: i32) -> (i32, i32, i32) {
    %c0_i32 = arith.constant 0 : i32
    %c0_i32_0 = arith.constant 0 : i32
    %c0_i32_1 = arith.constant 0 : i32
    %c0_i32_2 = arith.constant 0 : i32
    return %c0_i32, %c0_i32_0, %c0_i32_1 : i32, i32, i32
  }
  func.func @transform_19(%arg0: i32) -> (i32, i32) {
    %c0_i32 = arith.constant 0 : i32
    %c0_i32_0 = arith.constant 0 : i32
    %c0_i32_1 = arith.constant 0 : i32
    return %c0_i32, %c0_i32_0 : i32, i32
  }
  func.func @transform_20(%arg0: i32) -> (i32, i32) {
    %c0_i32 = arith.constant 0 : i32
    %c0_i32_0 = arith.constant 0 : i32
    %c0_i32_1 = arith.constant 0 : i32
    return %c0_i32, %c0_i32_0 : i32, i32
  }
  func.func @transform_21(%arg0: i32) -> (i32, i32) {
    %c0_i32 = arith.constant 0 : i32
    %c0_i32_0 = arith.constant 0 : i32
    %c0_i32_1 = arith.constant 0 : i32
    return %c0_i32, %c0_i32_0 : i32, i32
  }
  func.func @transform_22(%arg0: i32) -> (i32, i32) {
    %c0_i32 = arith.constant 0 : i32
    %c0_i32_0 = arith.constant 0 : i32
    %c0_i32_1 = arith.constant 0 : i32
    return %c0_i32, %c0_i32_0 : i32, i32
  }
  func.func @transform_23(%arg0: i32) -> (i32, i32) {
    %c0_i32 = arith.constant 0 : i32
    %c0_i32_0 = arith.constant 0 : i32
    %c0_i32_1 = arith.constant 0 : i32
    return %c0_i32, %c0_i32_0 : i32, i32
  }
  func.func @transform_24(%arg0: i32) -> (i32, i32) {
    %c0_i32 = arith.constant 0 : i32
    %c0_i32_0 = arith.constant 0 : i32
    %c0_i32_1 = arith.constant 0 : i32
    return %c0_i32, %c0_i32_0 : i32, i32
  }
  func.func @transform_25(%arg0: i32) -> (i32, i32) {
    %c0_i32 = arith.constant 0 : i32
    %c0_i32_0 = arith.constant 0 : i32
    %c0_i32_1 = arith.constant 0 : i32
    return %c0_i32, %c0_i32_0 : i32, i32
  }
  func.func @transform_26(%arg0: i32) -> (i32, i32) {
    %c0_i32 = arith.constant 0 : i32
    %c0_i32_0 = arith.constant 0 : i32
    %c0_i32_1 = arith.constant 0 : i32
    return %c0_i32, %c0_i32_0 : i32, i32
  }
  func.func @transform_27(%arg0: i32) -> (i32, i32) {
    %c0_i32 = arith.constant 0 : i32
    %c0_i32_0 = arith.constant 0 : i32
    %c0_i32_1 = arith.constant 0 : i32
    return %c0_i32, %c0_i32_0 : i32, i32
  }
  func.func @transform_28(%arg0: i32) -> (i32, i32, i32) {
    %c0_i32 = arith.constant 0 : i32
    %c0_i32_0 = arith.constant 0 : i32
    %c0_i32_1 = arith.constant 0 : i32
    return %arg0, %c0_i32, %c0_i32_0 : i32, i32, i32
  }
}

</mosaic_0001>

<llo_original>
// kernel: tpu_custom_call.1
$region0: #{tpu_custom_call.1}
  #allocation0 [shape = 'u32[]', space=smem, size = 0x4, offset = 0x4, fixed_abs, tag = 'smem constant byte address 0x4 - core index']
  #allocation1 [shape = 'u32[72,128]{1,0:T(1,128)}', space=vmem, size = 0x9000, scoped, tag = 'internal scratch']
  %s0 = inlined_call_operand.vmem [shape: f32[2,8,32], index: 0, kind: input, shape index: {}]
  %s1 = inlined_call_operand.vmem [shape: f32[2,8,32], index: 1, kind: input, shape index: {}]
  %s2 = inlined_call_operand.vmem [shape: f32[4,32,8], index: 2, kind: input, shape index: {}]
  %s3 = inlined_call_operand.vmem [shape: f32[4,1,8], index: 3, kind: input, shape index: {}]
  %s4 = inlined_call_operand.vmem [shape: f32[4,32,8], index: 4, kind: input, shape index: {}]
  %s5 = inlined_call_operand.vmem [shape: f32[4,1,8], index: 5, kind: input, shape index: {}]
  %s6 = inlined_call_operand.vmem [shape: f32[4,32,8], index: 6, kind: input, shape index: {}]
  %s7 = inlined_call_operand.vmem [shape: f32[4,1,8], index: 7, kind: input, shape index: {}]
  %s8 = inlined_call_operand.vmem [shape: f32[4,8,32], index: 8, kind: input, shape index: {}]
  %s9 = inlined_call_operand.vmem [shape: f32[1,32], index: 9, kind: input, shape index: {}]
  %s10 = inlined_call_operand.vmem [shape: f32[1,32], index: 10, kind: input, shape index: {}]
  %s11 = inlined_call_operand.vmem [shape: f32[1,32], index: 11, kind: input, shape index: {}]
  %s12 = inlined_call_operand.vmem [shape: f32[4,32,8], index: 12, kind: input, shape index: {}]
  %s13 = inlined_call_operand.vmem [shape: f32[4,1,8], index: 13, kind: input, shape index: {}]
  %s14 = inlined_call_operand.vmem [shape: f32[4,32,8], index: 14, kind: input, shape index: {}]
  %s15 = inlined_call_operand.vmem [shape: f32[4,1,8], index: 15, kind: input, shape index: {}]
  %s16 = inlined_call_operand.vmem [shape: f32[4,32,8], index: 16, kind: input, shape index: {}]
  %s17 = inlined_call_operand.vmem [shape: f32[4,1,8], index: 17, kind: input, shape index: {}]
  %s18 = inlined_call_operand.vmem [shape: f32[4,8,32], index: 18, kind: input, shape index: {}]
  %s19 = inlined_call_operand.vmem [shape: f32[1,32], index: 19, kind: input, shape index: {}]
  %s20 = inlined_call_operand.vmem [shape: f32[1,32], index: 20, kind: input, shape index: {}]
  %s21 = inlined_call_operand.vmem [shape: f32[1,32], index: 21, kind: input, shape index: {}]
  %s22 = inlined_call_operand.vmem [shape: f32[32,64], index: 22, kind: input, shape index: {}]
  %s23 = inlined_call_operand.vmem [shape: f32[1,64], index: 23, kind: input, shape index: {}]
  %s24 = inlined_call_operand.vmem [shape: f32[64,32], index: 24, kind: input, shape index: {}]
  %s25 = inlined_call_operand.vmem [shape: f32[1,32], index: 25, kind: input, shape index: {}]
  %s26 = inlined_call_operand.vmem [shape: f32[1,32], index: 26, kind: input, shape index: {}]
  %s27 = inlined_call_operand.vmem [shape: f32[1,32], index: 27, kind: input, shape index: {}]
  %s28 = inlined_call_operand.hbm [shape: f32[2,8,32], index: 28, kind: output, shape index: {}]
  %s29 = sld [smem:[#allocation0]]
  $region145: #{tpu_custom_call.1} parent=0
    _
  %s31 = ssub.s32 1, %s29
  %s32 = scalar_select 0, %s31, %s29
  $region1: #{tpu_custom_call.1} parent=0
    #allocation2 [shape = 'u8[8192]{0}', space=vmem, size = 0x2000, scoped, tag = 'output window, operand 0']
    #allocation3 [shape = 's32[2]{0}', space=sflag, size = 0x8, scoped, tag = 'scoped memory for tpu_custom_call.1']
    %33 = vsyncpa [#allocation3], 0
    %s34 = scalar_lea.sflag [#allocation3], 1
    %35 = vsyncpa %s34, 0
    loop: start=0, step=1, limit=4
    $region2: #{tpu_custom_call.1} parent=1 // loop_pre_header
      _
    $region3: #{tpu_custom_call.1} parent=1 // loop_header
      %s37 = sphi 0, %s41
      %p38 = scmp.ge.s32.totalorder %s37, 4
      %s47 = sphi 0, %s49
      %s50 = sphi 0, %s47
      %s51 = sphi 0, %s50
      %s67 = sphi 0, %s51
      %s73 = sphi 0, %s75
      %s76 = sphi 0, %s73
      %s77 = sphi 0, %s76
      %s93 = sphi 0, %s77
      %s97 = sphi 0, %s97
      %s99 = sphi 0, %s97
      %s100 = sphi 0, %s99
      %s114 = sphi 0, %s100
      %s118 = sphi 0, %s118
      %s120 = sphi 0, %s118
      %s121 = sphi 0, %s120
      %s135 = sphi 0, %s121
      %s139 = sphi 0, %s139
      %s141 = sphi 0, %s139
      %s142 = sphi 0, %s141
      %s156 = sphi 0, %s142
      %s160 = sphi 0, %s160
      %s162 = sphi 0, %s160
      %s163 = sphi 0, %s162
      %s177 = sphi 0, %s163
      %s181 = sphi 0, %s181
      %s183 = sphi 0, %s181
      %s184 = sphi 0, %s183
      %s198 = sphi 0, %s184
      %s202 = sphi 0, %s202
      %s204 = sphi 0, %s202
      %s205 = sphi 0, %s204
      %s219 = sphi 0, %s205
      %s223 = sphi 0, %s223
      %s225 = sphi 0, %s223
      %s226 = sphi 0, %s225
      %s240 = sphi 0, %s226
      %s244 = sphi 0, %s244
      %s246 = sphi 0, %s244
      %s247 = sphi 0, %s246
      %s261 = sphi 0, %s247
      %s265 = sphi 0, %s265
      %s267 = sphi 0, %s265
      %s268 = sphi 0, %s267
      %s282 = sphi 0, %s268
      %s286 = sphi 0, %s286
      %s288 = sphi 0, %s286
      %s289 = sphi 0, %s288
      %s303 = sphi 0, %s289
      %s307 = sphi 0, %s307
      %s309 = sphi 0, %s307
      %s310 = sphi 0, %s309
      %s324 = sphi 0, %s310
      %s328 = sphi 0, %s328
      %s330 = sphi 0, %s328
      %s331 = sphi 0, %s330
      %s345 = sphi 0, %s331
      %s349 = sphi 0, %s349
      %s351 = sphi 0, %s349
      %s352 = sphi 0, %s351
      %s366 = sphi 0, %s352
      %s370 = sphi 0, %s370
      %s372 = sphi 0, %s370
      %s373 = sphi 0, %s372
      %s387 = sphi 0, %s373
      %s391 = sphi 0, %s391
      %s393 = sphi 0, %s391
      %s394 = sphi 0, %s393
      %s408 = sphi 0, %s394
      %s412 = sphi 0, %s412
      %s414 = sphi 0, %s412
      %s415 = sphi 0, %s414
      %s429 = sphi 0, %s415
      %s433 = sphi 0, %s433
      %s435 = sphi 0, %s433
      %s436 = sphi 0, %s435
      %s450 = sphi 0, %s436
      %s454 = sphi 0, %s454
      %s456 = sphi 0, %s454
      %s457 = sphi 0, %s456
      %s471 = sphi 0, %s457
      %s475 = sphi 0, %s475
      %s477 = sphi 0, %s475
      %s478 = sphi 0, %s477
      %s492 = sphi 0, %s478
      %s496 = sphi 0, %s496
      %s498 = sphi 0, %s496
      %s499 = sphi 0, %s498
      %s513 = sphi 0, %s499
      %s517 = sphi 0, %s517
      %s519 = sphi 0, %s517
      %s520 = sphi 0, %s519
      %s534 = sphi 0, %s520
      %s538 = sphi 0, %s538
      %s540 = sphi 0, %s538
      %s541 = sphi 0, %s540
      %s555 = sphi 0, %s541
      %s559 = sphi 0, %s559
      %s561 = sphi 0, %s559
      %s562 = sphi 0, %s561
      %s576 = sphi 0, %s562
      %s580 = sphi 0, %s580
      %s582 = sphi 0, %s580
      %s583 = sphi 0, %s582
      %s597 = sphi 0, %s583
      %s601 = sphi 0, %s601
      %s603 = sphi 0, %s601
      %s604 = sphi 0, %s603
      %s618 = sphi 0, %s604
      %s622 = sphi 0, %s622
      %s624 = sphi 0, %s622
      %s625 = sphi 0, %s624
      %s639 = sphi 0, %s625
      %s645 = sphi 0, %s647
      %s648 = sphi 0, %s645
      %s649 = sphi 0, %s648
      %s665 = sphi 0, %s649
    $region4: #{tpu_custom_call.1} parent=1 // loop_header_branch
      %40 = sbr.rel (%p38) target = $region8
    $region5: #{tpu_custom_call.1} parent=1 // loop_body
      %s42 = ssub.s32 %s37, 1
      %s43 = ssub.s32 %s37, 2
      %s44 = sadd.s32 %s37, 1
      %s45 = ssub.s32 %s37, %s44
      %p46 = scmp.eq.s32.totalorder %s45, 0
      %s48 = sadd.s32 %s47, 1
      %s49 = scalar_select %p46, %s47, %s48
      %p52 = pneg %p46
      %p53 = scmp.eq.s32.totalorder %s37, 1
      %p54 = por %p52, %p53
      %p55 = scmp.ne.s32.totalorder %s47, %s50
      %p56 = scmp.eq.s32.totalorder %s37, 0
      %p57 = por %p55, %p56
      %p58 = scmp.ne.s32.totalorder %s47, %s50
      %p59 = scmp.eq.s32.totalorder %s42, 1
      %p60 = por %p58, %p59
      %p61 = scmp.ne.s32.totalorder %s50, %s51
      %p62 = scmp.eq.s32.totalorder %s42, 0
      %p63 = por %p61, %p62
      %p64 = scmp.ne.s32.totalorder %s50, %s51
      %p65 = scmp.eq.s32.totalorder %s43, 1
      %p66 = por %p64, %p65
      %p68 = scmp.ne.s32.totalorder %s51, %s67
      %p69 = scmp.eq.s32.totalorder %s43, 0
      %p70 = por %p68, %p69
      %s71 = ssub.s32 %s37, %s44
      %p72 = scmp.eq.s32.totalorder %s71, 0
      %s74 = sadd.s32 %s73, 1
      %s75 = scalar_select %p72, %s73, %s74
      %p78 = pneg %p72
      %p79 = scmp.eq.s32.totalorder %s37, 1
      %p80 = por %p78, %p79
      %p81 = scmp.ne.s32.totalorder %s73, %s76
      %p82 = scmp.eq.s32.totalorder %s37, 0
      %p83 = por %p81, %p82
      %p84 = scmp.ne.s32.totalorder %s73, %s76
      %p85 = scmp.eq.s32.totalorder %s42, 1
      %p86 = por %p84, %p85
      %p87 = scmp.ne.s32.totalorder %s76, %s77
      %p88 = scmp.eq.s32.totalorder %s42, 0
      %p89 = por %p87, %p88
      %p90 = scmp.ne.s32.totalorder %s76, %s77
      %p91 = scmp.eq.s32.totalorder %s43, 1
      %p92 = por %p90, %p91
      %p94 = scmp.ne.s32.totalorder %s77, %s93
      %p95 = scmp.eq.s32.totalorder %s43, 0
      %p96 = por %p94, %p95
      %s98 = sadd.s32 %s97, 1
      %p101 = scmp.eq.s32.totalorder %s37, 1
      %p102 = scmp.ne.s32.totalorder %s97, %s99
      %p103 = scmp.eq.s32.totalorder %s37, 0
      %p104 = por %p102, %p103
      %p105 = scmp.ne.s32.totalorder %s97, %s99
      %p106 = scmp.eq.s32.totalorder %s42, 1
      %p107 = por %p105, %p106
      %p108 = scmp.ne.s32.totalorder %s99, %s100
      %p109 = scmp.eq.s32.totalorder %s42, 0
      %p110 = por %p108, %p109
      %p111 = scmp.ne.s32.totalorder %s99, %s100
      %p112 = scmp.eq.s32.totalorder %s43, 1
      %p113 = por %p111, %p112
      %p115 = scmp.ne.s32.totalorder %s100, %s114
      %p116 = scmp.eq.s32.totalorder %s43, 0
      %p117 = por %p115, %p116
      %s119 = sadd.s32 %s118, 1
      %p122 = scmp.eq.s32.totalorder %s37, 1
      %p123 = scmp.ne.s32.totalorder %s118, %s120
      %p124 = scmp.eq.s32.totalorder %s37, 0
      %p125 = por %p123, %p124
      %p126 = scmp.ne.s32.totalorder %s118, %s120
      %p127 = scmp.eq.s32.totalorder %s42, 1
      %p128 = por %p126, %p127
      %p129 = scmp.ne.s32.totalorder %s120, %s121
      %p130 = scmp.eq.s32.totalorder %s42, 0
      %p131 = por %p129, %p130
      %p132 = scmp.ne.s32.totalorder %s120, %s121
      %p133 = scmp.eq.s32.totalorder %s43, 1
      %p134 = por %p132, %p133
      %p136 = scmp.ne.s32.totalorder %s121, %s135
      %p137 = scmp.eq.s32.totalorder %s43, 0
      %p138 = por %p136, %p137
      %s140 = sadd.s32 %s139, 1
      %p143 = scmp.eq.s32.totalorder %s37, 1
      %p144 = scmp.ne.s32.totalorder %s139, %s141
      %p145 = scmp.eq.s32.totalorder %s37, 0
      %p146 = por %p144, %p145
      %p147 = scmp.ne.s32.totalorder %s139, %s141
      %p148 = scmp.eq.s32.totalorder %s42, 1
      %p149 = por %p147, %p148
      %p150 = scmp.ne.s32.totalorder %s141, %s142
      %p151 = scmp.eq.s32.totalorder %s42, 0
      %p152 = por %p150, %p151
      %p153 = scmp.ne.s32.totalorder %s141, %s142
      %p154 = scmp.eq.s32.totalorder %s43, 1
      %p155 = por %p153, %p154
      %p157 = scmp.ne.s32.totalorder %s142, %s156
      %p158 = scmp.eq.s32.totalorder %s43, 0
      %p159 = por %p157, %p158
      %s161 = sadd.s32 %s160, 1
      %p164 = scmp.eq.s32.totalorder %s37, 1
      %p165 = scmp.ne.s32.totalorder %s160, %s162
      %p166 = scmp.eq.s32.totalorder %s37, 0
      %p167 = por %p165, %p166
      %p168 = scmp.ne.s32.totalorder %s160, %s162
      %p169 = scmp.eq.s32.totalorder %s42, 1
      %p170 = por %p168, %p169
      %p171 = scmp.ne.s32.totalorder %s162, %s163
      %p172 = scmp.eq.s32.totalorder %s42, 0
      %p173 = por %p171, %p172
      %p174 = scmp.ne.s32.totalorder %s162, %s163
      %p175 = scmp.eq.s32.totalorder %s43, 1
      %p176 = por %p174, %p175
      %p178 = scmp.ne.s32.totalorder %s163, %s177
      %p179 = scmp.eq.s32.totalorder %s43, 0
      %p180 = por %p178, %p179
      %s182 = sadd.s32 %s181, 1
      %p185 = scmp.eq.s32.totalorder %s37, 1
      %p186 = scmp.ne.s32.totalorder %s181, %s183
      %p187 = scmp.eq.s32.totalorder %s37, 0
      %p188 = por %p186, %p187
      %p189 = scmp.ne.s32.totalorder %s181, %s183
      %p190 = scmp.eq.s32.totalorder %s42, 1
      %p191 = por %p189, %p190
      %p192 = scmp.ne.s32.totalorder %s183, %s184
      %p193 = scmp.eq.s32.totalorder %s42, 0
      %p194 = por %p192, %p193
      %p195 = scmp.ne.s32.totalorder %s183, %s184
      %p196 = scmp.eq.s32.totalorder %s43, 1
      %p197 = por %p195, %p196
      %p199 = scmp.ne.s32.totalorder %s184, %s198
      %p200 = scmp.eq.s32.totalorder %s43, 0
      %p201 = por %p199, %p200
      %s203 = sadd.s32 %s202, 1
      %p206 = scmp.eq.s32.totalorder %s37, 1
      %p207 = scmp.ne.s32.totalorder %s202, %s204
      %p208 = scmp.eq.s32.totalorder %s37, 0
      %p209 = por %p207, %p208
      %p210 = scmp.ne.s32.totalorder %s202, %s204
      %p211 = scmp.eq.s32.totalorder %s42, 1
      %p212 = por %p210, %p211
      %p213 = scmp.ne.s32.totalorder %s204, %s205
      %p214 = scmp.eq.s32.totalorder %s42, 0
      %p215 = por %p213, %p214
      %p216 = scmp.ne.s32.totalorder %s204, %s205
      %p217 = scmp.eq.s32.totalorder %s43, 1
      %p218 = por %p216, %p217
      %p220 = scmp.ne.s32.totalorder %s205, %s219
      %p221 = scmp.eq.s32.totalorder %s43, 0
      %p222 = por %p220, %p221
      %s224 = sadd.s32 %s223, 1
      %p227 = scmp.eq.s32.totalorder %s37, 1
      %p228 = scmp.ne.s32.totalorder %s223, %s225
      %p229 = scmp.eq.s32.totalorder %s37, 0
      %p230 = por %p228, %p229
      %p231 = scmp.ne.s32.totalorder %s223, %s225
      %p232 = scmp.eq.s32.totalorder %s42, 1
      %p233 = por %p231, %p232
      %p234 = scmp.ne.s32.totalorder %s225, %s226
      %p235 = scmp.eq.s32.totalorder %s42, 0
      %p236 = por %p234, %p235
      %p237 = scmp.ne.s32.totalorder %s225, %s226
      %p238 = scmp.eq.s32.totalorder %s43, 1
      %p239 = por %p237, %p238
      %p241 = scmp.ne.s32.totalorder %s226, %s240
      %p242 = scmp.eq.s32.totalorder %s43, 0
      %p243 = por %p241, %p242
      %s245 = sadd.s32 %s244, 1
      %p248 = scmp.eq.s32.totalorder %s37, 1
      %p249 = scmp.ne.s32.totalorder %s244, %s246
      %p250 = scmp.eq.s32.totalorder %s37, 0
      %p251 = por %p249, %p250
      %p252 = scmp.ne.s32.totalorder %s244, %s246
      %p253 = scmp.eq.s32.totalorder %s42, 1
      %p254 = por %p252, %p253
      %p255 = scmp.ne.s32.totalorder %s246, %s247
      %p256 = scmp.eq.s32.totalorder %s42, 0
      %p257 = por %p255, %p256
      %p258 = scmp.ne.s32.totalorder %s246, %s247
      %p259 = scmp.eq.s32.totalorder %s43, 1
      %p260 = por %p258, %p259
      %p262 = scmp.ne.s32.totalorder %s247, %s261
      %p263 = scmp.eq.s32.totalorder %s43, 0
      %p264 = por %p262, %p263
      %s266 = sadd.s32 %s265, 1
      %p269 = scmp.eq.s32.totalorder %s37, 1
      %p270 = scmp.ne.s32.totalorder %s265, %s267
      %p271 = scmp.eq.s32.totalorder %s37, 0
      %p272 = por %p270, %p271
      %p273 = scmp.ne.s32.totalorder %s265, %s267
      %p274 = scmp.eq.s32.totalorder %s42, 1
      %p275 = por %p273, %p274
      %p276 = scmp.ne.s32.totalorder %s267, %s268
      %p277 = scmp.eq.s32.totalorder %s42, 0
      %p278 = por %p276, %p277
      %p279 = scmp.ne.s32.totalorder %s267, %s268
      %p280 = scmp.eq.s32.totalorder %s43, 1
      %p281 = por %p279, %p280
      %p283 = scmp.ne.s32.totalorder %s268, %s282
      %p284 = scmp.eq.s32.totalorder %s43, 0
      %p285 = por %p283, %p284
      %s287 = sadd.s32 %s286, 1
      %p290 = scmp.eq.s32.totalorder %s37, 1
      %p291 = scmp.ne.s32.totalorder %s286, %s288
      %p292 = scmp.eq.s32.totalorder %s37, 0
      %p293 = por %p291, %p292
      %p294 = scmp.ne.s32.totalorder %s286, %s288
      %p295 = scmp.eq.s32.totalorder %s42, 1
      %p296 = por %p294, %p295
      %p297 = scmp.ne.s32.totalorder %s288, %s289
      %p298 = scmp.eq.s32.totalorder %s42, 0
      %p299 = por %p297, %p298
      %p300 = scmp.ne.s32.totalorder %s288, %s289
      %p301 = scmp.eq.s32.totalorder %s43, 1
      %p302 = por %p300, %p301
      %p304 = scmp.ne.s32.totalorder %s289, %s303
      %p305 = scmp.eq.s32.totalorder %s43, 0
      %p306 = por %p304, %p305
      %s308 = sadd.s32 %s307, 1
      %p311 = scmp.eq.s32.totalorder %s37, 1
      %p312 = scmp.ne.s32.totalorder %s307, %s309
      %p313 = scmp.eq.s32.totalorder %s37, 0
      %p314 = por %p312, %p313
      %p315 = scmp.ne.s32.totalorder %s307, %s309
      %p316 = scmp.eq.s32.totalorder %s42, 1
      %p317 = por %p315, %p316
      %p318 = scmp.ne.s32.totalorder %s309, %s310
      %p319 = scmp.eq.s32.totalorder %s42, 0
      %p320 = por %p318, %p319
      %p321 = scmp.ne.s32.totalorder %s309, %s310
      %p322 = scmp.eq.s32.totalorder %s43, 1
      %p323 = por %p321, %p322
      %p325 = scmp.ne.s32.totalorder %s310, %s324
      %p326 = scmp.eq.s32.totalorder %s43, 0
      %p327 = por %p325, %p326
      %s329 = sadd.s32 %s328, 1
      %p332 = scmp.eq.s32.totalorder %s37, 1
      %p333 = scmp.ne.s32.totalorder %s328, %s330
      %p334 = scmp.eq.s32.totalorder %s37, 0
      %p335 = por %p333, %p334
      %p336 = scmp.ne.s32.totalorder %s328, %s330
      %p337 = scmp.eq.s32.totalorder %s42, 1
      %p338 = por %p336, %p337
      %p339 = scmp.ne.s32.totalorder %s330, %s331
      %p340 = scmp.eq.s32.totalorder %s42, 0
      %p341 = por %p339, %p340
      %p342 = scmp.ne.s32.totalorder %s330, %s331
      %p343 = scmp.eq.s32.totalorder %s43, 1
      %p344 = por %p342, %p343
      %p346 = scmp.ne.s32.totalorder %s331, %s345
      %p347 = scmp.eq.s32.totalorder %s43, 0
      %p348 = por %p346, %p347
      %s350 = sadd.s32 %s349, 1
      %p353 = scmp.eq.s32.totalorder %s37, 1
      %p354 = scmp.ne.s32.totalorder %s349, %s351
      %p355 = scmp.eq.s32.totalorder %s37, 0
      %p356 = por %p354, %p355
      %p357 = scmp.ne.s32.totalorder %s349, %s351
      %p358 = scmp.eq.s32.totalorder %s42, 1
      %p359 = por %p357, %p358
      %p360 = scmp.ne.s32.totalorder %s351, %s352
      %p361 = scmp.eq.s32.totalorder %s42, 0
      %p362 = por %p360, %p361
      %p363 = scmp.ne.s32.totalorder %s351, %s352
      %p364 = scmp.eq.s32.totalorder %s43, 1
      %p365 = por %p363, %p364
      %p367 = scmp.ne.s32.totalorder %s352, %s366
      %p368 = scmp.eq.s32.totalorder %s43, 0
      %p369 = por %p367, %p368
      %s371 = sadd.s32 %s370, 1
      %p374 = scmp.eq.s32.totalorder %s37, 1
      %p375 = scmp.ne.s32.totalorder %s370, %s372
      %p376 = scmp.eq.s32.totalorder %s37, 0
      %p377 = por %p375, %p376
      %p378 = scmp.ne.s32.totalorder %s370, %s372
      %p379 = scmp.eq.s32.totalorder %s42, 1
      %p380 = por %p378, %p379
      %p381 = scmp.ne.s32.totalorder %s372, %s373
      %p382 = scmp.eq.s32.totalorder %s42, 0
      %p383 = por %p381, %p382
      %p384 = scmp.ne.s32.totalorder %s372, %s373
      %p385 = scmp.eq.s32.totalorder %s43, 1
      %p386 = por %p384, %p385
      %p388 = scmp.ne.s32.totalorder %s373, %s387
      %p389 = scmp.eq.s32.totalorder %s43, 0
      %p390 = por %p388, %p389
      %s392 = sadd.s32 %s391, 1
      %p395 = scmp.eq.s32.totalorder %s37, 1
      %p396 = scmp.ne.s32.totalorder %s391, %s393
      %p397 = scmp.eq.s32.totalorder %s37, 0
      %p398 = por %p396, %p397
      %p399 = scmp.ne.s32.totalorder %s391, %s393
      %p400 = scmp.eq.s32.totalorder %s42, 1
      %p401 = por %p399, %p400
      %p402 = scmp.ne.s32.totalorder %s393, %s394
      %p403 = scmp.eq.s32.totalorder %s42, 0
      %p404 = por %p402, %p403
      %p405 = scmp.ne.s32.totalorder %s393, %s394
      %p406 = scmp.eq.s32.totalorder %s43, 1
      %p407 = por %p405, %p406
      %p409 = scmp.ne.s32.totalorder %s394, %s408
      %p410 = scmp.eq.s32.totalorder %s43, 0
      %p411 = por %p409, %p410
      %s413 = sadd.s32 %s412, 1
      %p416 = scmp.eq.s32.totalorder %s37, 1
      %p417 = scmp.ne.s32.totalorder %s412, %s414
      %p418 = scmp.eq.s32.totalorder %s37, 0
      %p419 = por %p417, %p418
      %p420 = scmp.ne.s32.totalorder %s412, %s414
      %p421 = scmp.eq.s32.totalorder %s42, 1
      %p422 = por %p420, %p421
      %p423 = scmp.ne.s32.totalorder %s414, %s415
      %p424 = scmp.eq.s32.totalorder %s42, 0
      %p425 = por %p423, %p424
      %p426 = scmp.ne.s32.totalorder %s414, %s415
      %p427 = scmp.eq.s32.totalorder %s43, 1
      %p428 = por %p426, %p427
      %p430 = scmp.ne.s32.totalorder %s415, %s429
      %p431 = scmp.eq.s32.totalorder %s43, 0
      %p432 = por %p430, %p431
      %s434 = sadd.s32 %s433, 1
      %p437 = scmp.eq.s32.totalorder %s37, 1
      %p438 = scmp.ne.s32.totalorder %s433, %s435
      %p439 = scmp.eq.s32.totalorder %s37, 0
      %p440 = por %p438, %p439
      %p441 = scmp.ne.s32.totalorder %s433, %s435
      %p442 = scmp.eq.s32.totalorder %s42, 1
      %p443 = por %p441, %p442
      %p444 = scmp.ne.s32.totalorder %s435, %s436
      %p445 = scmp.eq.s32.totalorder %s42, 0
      %p446 = por %p444, %p445
      %p447 = scmp.ne.s32.totalorder %s435, %s436
      %p448 = scmp.eq.s32.totalorder %s43, 1
      %p449 = por %p447, %p448
      %p451 = scmp.ne.s32.totalorder %s436, %s450
      %p452 = scmp.eq.s32.totalorder %s43, 0
      %p453 = por %p451, %p452
      %s455 = sadd.s32 %s454, 1
      %p458 = scmp.eq.s32.totalorder %s37, 1
      %p459 = scmp.ne.s32.totalorder %s454, %s456
      %p460 = scmp.eq.s32.totalorder %s37, 0
      %p461 = por %p459, %p460
      %p462 = scmp.ne.s32.totalorder %s454, %s456
      %p463 = scmp.eq.s32.totalorder %s42, 1
      %p464 = por %p462, %p463
      %p465 = scmp.ne.s32.totalorder %s456, %s457
      %p466 = scmp.eq.s32.totalorder %s42, 0
      %p467 = por %p465, %p466
      %p468 = scmp.ne.s32.totalorder %s456, %s457
      %p469 = scmp.eq.s32.totalorder %s43, 1
      %p470 = por %p468, %p469
      %p472 = scmp.ne.s32.totalorder %s457, %s471
      %p473 = scmp.eq.s32.totalorder %s43, 0
      %p474 = por %p472, %p473
      %s476 = sadd.s32 %s475, 1
      %p479 = scmp.eq.s32.totalorder %s37, 1
      %p480 = scmp.ne.s32.totalorder %s475, %s477
      %p481 = scmp.eq.s32.totalorder %s37, 0
      %p482 = por %p480, %p481
      %p483 = scmp.ne.s32.totalorder %s475, %s477
      %p484 = scmp.eq.s32.totalorder %s42, 1
      %p485 = por %p483, %p484
      %p486 = scmp.ne.s32.totalorder %s477, %s478
      %p487 = scmp.eq.s32.totalorder %s42, 0
      %p488 = por %p486, %p487
      %p489 = scmp.ne.s32.totalorder %s477, %s478
      %p490 = scmp.eq.s32.totalorder %s43, 1
      %p491 = por %p489, %p490
      %p493 = scmp.ne.s32.totalorder %s478, %s492
      %p494 = scmp.eq.s32.totalorder %s43, 0
      %p495 = por %p493, %p494
      %s497 = sadd.s32 %s496, 1
      %p500 = scmp.eq.s32.totalorder %s37, 1
      %p501 = scmp.ne.s32.totalorder %s496, %s498
      %p502 = scmp.eq.s32.totalorder %s37, 0
      %p503 = por %p501, %p502
      %p504 = scmp.ne.s32.totalorder %s496, %s498
      %p505 = scmp.eq.s32.totalorder %s42, 1
      %p506 = por %p504, %p505
      %p507 = scmp.ne.s32.totalorder %s498, %s499
      %p508 = scmp.eq.s32.totalorder %s42, 0
      %p509 = por %p507, %p508
      %p510 = scmp.ne.s32.totalorder %s498, %s499
      %p511 = scmp.eq.s32.totalorder %s43, 1
      %p512 = por %p510, %p511
      %p514 = scmp.ne.s32.totalorder %s499, %s513
      %p515 = scmp.eq.s32.totalorder %s43, 0
      %p516 = por %p514, %p515
      %s518 = sadd.s32 %s517, 1
      %p521 = scmp.eq.s32.totalorder %s37, 1
      %p522 = scmp.ne.s32.totalorder %s517, %s519
      %p523 = scmp.eq.s32.totalorder %s37, 0
      %p524 = por %p522, %p523
      %p525 = scmp.ne.s32.totalorder %s517, %s519
      %p526 = scmp.eq.s32.totalorder %s42, 1
      %p527 = por %p525, %p526
      %p528 = scmp.ne.s32.totalorder %s519, %s520
      %p529 = scmp.eq.s32.totalorder %s42, 0
      %p530 = por %p528, %p529
      %p531 = scmp.ne.s32.totalorder %s519, %s520
      %p532 = scmp.eq.s32.totalorder %s43, 1
      %p533 = por %p531, %p532
      %p535 = scmp.ne.s32.totalorder %s520, %s534
      %p536 = scmp.eq.s32.totalorder %s43, 0
      %p537 = por %p535, %p536
      %s539 = sadd.s32 %s538, 1
      %p542 = scmp.eq.s32.totalorder %s37, 1
      %p543 = scmp.ne.s32.totalorder %s538, %s540
      %p544 = scmp.eq.s32.totalorder %s37, 0
      %p545 = por %p543, %p544
      %p546 = scmp.ne.s32.totalorder %s538, %s540
      %p547 = scmp.eq.s32.totalorder %s42, 1
      %p548 = por %p546, %p547
      %p549 = scmp.ne.s32.totalorder %s540, %s541
      %p550 = scmp.eq.s32.totalorder %s42, 0
      %p551 = por %p549, %p550
      %p552 = scmp.ne.s32.totalorder %s540, %s541
      %p553 = scmp.eq.s32.totalorder %s43, 1
      %p554 = por %p552, %p553
      %p556 = scmp.ne.s32.totalorder %s541, %s555
      %p557 = scmp.eq.s32.totalorder %s43, 0
      %p558 = por %p556, %p557
      %s560 = sadd.s32 %s559, 1
      %p563 = scmp.eq.s32.totalorder %s37, 1
      %p564 = scmp.ne.s32.totalorder %s559, %s561
      %p565 = scmp.eq.s32.totalorder %s37, 0
      %p566 = por %p564, %p565
      %p567 = scmp.ne.s32.totalorder %s559, %s561
      %p568 = scmp.eq.s32.totalorder %s42, 1
      %p569 = por %p567, %p568
      %p570 = scmp.ne.s32.totalorder %s561, %s562
      %p571 = scmp.eq.s32.totalorder %s42, 0
      %p572 = por %p570, %p571
      %p573 = scmp.ne.s32.totalorder %s561, %s562
      %p574 = scmp.eq.s32.totalorder %s43, 1
      %p575 = por %p573, %p574
      %p577 = scmp.ne.s32.totalorder %s562, %s576
      %p578 = scmp.eq.s32.totalorder %s43, 0
      %p579 = por %p577, %p578
      %s581 = sadd.s32 %s580, 1
      %p584 = scmp.eq.s32.totalorder %s37, 1
      %p585 = scmp.ne.s32.totalorder %s580, %s582
      %p586 = scmp.eq.s32.totalorder %s37, 0
      %p587 = por %p585, %p586
      %p588 = scmp.ne.s32.totalorder %s580, %s582
      %p589 = scmp.eq.s32.totalorder %s42, 1
      %p590 = por %p588, %p589
      %p591 = scmp.ne.s32.totalorder %s582, %s583
      %p592 = scmp.eq.s32.totalorder %s42, 0
      %p593 = por %p591, %p592
      %p594 = scmp.ne.s32.totalorder %s582, %s583
      %p595 = scmp.eq.s32.totalorder %s43, 1
      %p596 = por %p594, %p595
      %p598 = scmp.ne.s32.totalorder %s583, %s597
      %p599 = scmp.eq.s32.totalorder %s43, 0
      %p600 = por %p598, %p599
      %s602 = sadd.s32 %s601, 1
      %p605 = scmp.eq.s32.totalorder %s37, 1
      %p606 = scmp.ne.s32.totalorder %s601, %s603
      %p607 = scmp.eq.s32.totalorder %s37, 0
      %p608 = por %p606, %p607
      %p609 = scmp.ne.s32.totalorder %s601, %s603
      %p610 = scmp.eq.s32.totalorder %s42, 1
      %p611 = por %p609, %p610
      %p612 = scmp.ne.s32.totalorder %s603, %s604
      %p613 = scmp.eq.s32.totalorder %s42, 0
      %p614 = por %p612, %p613
      %p615 = scmp.ne.s32.totalorder %s603, %s604
      %p616 = scmp.eq.s32.totalorder %s43, 1
      %p617 = por %p615, %p616
      %p619 = scmp.ne.s32.totalorder %s604, %s618
      %p620 = scmp.eq.s32.totalorder %s43, 0
      %p621 = por %p619, %p620
      %s623 = sadd.s32 %s622, 1
      %p626 = scmp.eq.s32.totalorder %s37, 1
      %p627 = scmp.ne.s32.totalorder %s622, %s624
      %p628 = scmp.eq.s32.totalorder %s37, 0
      %p629 = por %p627, %p628
      %p630 = scmp.ne.s32.totalorder %s622, %s624
      %p631 = scmp.eq.s32.totalorder %s42, 1
      %p632 = por %p630, %p631
      %p633 = scmp.ne.s32.totalorder %s624, %s625
      %p634 = scmp.eq.s32.totalorder %s42, 0
      %p635 = por %p633, %p634
      %p636 = scmp.ne.s32.totalorder %s624, %s625
      %p637 = scmp.eq.s32.totalorder %s43, 1
      %p638 = por %p636, %p637
      %p640 = scmp.ne.s32.totalorder %s625, %s639
      %p641 = scmp.eq.s32.totalorder %s43, 0
      %p642 = por %p640, %p641
      %s643 = ssub.s32 %s37, %s44
      %p644 = scmp.eq.s32.totalorder %s643, 0
      %s646 = sadd.s32 %s645, 1
      %s647 = scalar_select %p644, %s645, %s646
      %p650 = pneg %p644
      %p651 = scmp.eq.s32.totalorder %s37, 1
      %p652 = por %p650, %p651
      %p653 = scmp.ne.s32.totalorder %s645, %s648
      %p654 = scmp.eq.s32.totalorder %s37, 0
      %p655 = por %p653, %p654
      %p656 = scmp.ne.s32.totalorder %s645, %s648
      %p657 = scmp.eq.s32.totalorder %s42, 1
      %p658 = por %p656, %p657
      %p659 = scmp.ne.s32.totalorder %s648, %s649
      %p660 = scmp.eq.s32.totalorder %s42, 0
      %p661 = por %p659, %p660
      %p662 = scmp.ne.s32.totalorder %s648, %s649
      %p663 = scmp.eq.s32.totalorder %s43, 1
      %p664 = por %p662, %p663
      %p666 = scmp.ne.s32.totalorder %s649, %s665
      %p667 = scmp.eq.s32.totalorder %s43, 0
      %p668 = por %p666, %p667
      %p669 = scmp.le.s32.totalorder 1, %s37
      %p670 = scmp.lt.s32.totalorder %s37, 3
      %p671 = pnand %p669, %p670
      %p672 = pneg %p671
      // Predicated region
      $region9: #{tpu_custom_call.1} parent=5 // pred_check
        _
      $region10: #{tpu_custom_call.1} parent=5 // pred_check_branch
        %674 = sbr.rel (%p671) target = $region12
      $region11: #{tpu_custom_call.1} parent=5 // pred_region
        %s675 = ssub.s32 %s37, 1
        // Predicated region
        $region13: #{tpu_custom_call.1} parent=11 // pred_check
          %p676 = pneg %p110
        $region14: #{tpu_custom_call.1} parent=11 // pred_check_branch
          %678 = sbr.rel (%p676) target = $region16
        $region15: #{tpu_custom_call.1} parent=11 // pred_region
          _
        $region16: #{tpu_custom_call.1} parent=11 // pred_fallthru
          _
        // Predicated region
        $region17: #{tpu_custom_call.1} parent=11 // pred_check
          %p679 = pneg %p131
        $region18: #{tpu_custom_call.1} parent=11 // pred_check_branch
          %681 = sbr.rel (%p679) target = $region20
        $region19: #{tpu_custom_call.1} parent=11 // pred_region
          _
        $region20: #{tpu_custom_call.1} parent=11 // pred_fallthru
          _
        // Predicated region
        $region21: #{tpu_custom_call.1} parent=11 // pred_check
          %p682 = pneg %p152
        $region22: #{tpu_custom_call.1} parent=11 // pred_check_branch
          %684 = sbr.rel (%p682) target = $region24
        $region23: #{tpu_custom_call.1} parent=11 // pred_region
          _
        $region24: #{tpu_custom_call.1} parent=11 // pred_fallthru
          _
        // Predicated region
        $region25: #{tpu_custom_call.1} parent=11 // pred_check
          %p685 = pneg %p173
        $region26: #{tpu_custom_call.1} parent=11 // pred_check_branch
          %687 = sbr.rel (%p685) target = $region28
        $region27: #{tpu_custom_call.1} parent=11 // pred_region
          _
        $region28: #{tpu_custom_call.1} parent=11 // pred_fallthru
          _
        // Predicated region
        $region29: #{tpu_custom_call.1} parent=11 // pred_check
          %p688 = pneg %p194
        $region30: #{tpu_custom_call.1} parent=11 // pred_check_branch
          %690 = sbr.rel (%p688) target = $region32
        $region31: #{tpu_custom_call.1} parent=11 // pred_region
          _
        $region32: #{tpu_custom_call.1} parent=11 // pred_fallthru
          _
        // Predicated region
        $region33: #{tpu_custom_call.1} parent=11 // pred_check
          %p691 = pneg %p215
        $region34: #{tpu_custom_call.1} parent=11 // pred_check_branch
          %693 = sbr.rel (%p691) target = $region36
        $region35: #{tpu_custom_call.1} parent=11 // pred_region
          _
        $region36: #{tpu_custom_call.1} parent=11 // pred_fallthru
          _
        // Predicated region
        $region37: #{tpu_custom_call.1} parent=11 // pred_check
          %p694 = pneg %p236
        $region38: #{tpu_custom_call.1} parent=11 // pred_check_branch
          %696 = sbr.rel (%p694) target = $region40
        $region39: #{tpu_custom_call.1} parent=11 // pred_region
          _
        $region40: #{tpu_custom_call.1} parent=11 // pred_fallthru
          _
        // Predicated region
        $region41: #{tpu_custom_call.1} parent=11 // pred_check
          %p697 = pneg %p257
        $region42: #{tpu_custom_call.1} parent=11 // pred_check_branch
          %699 = sbr.rel (%p697) target = $region44
        $region43: #{tpu_custom_call.1} parent=11 // pred_region
          _
        $region44: #{tpu_custom_call.1} parent=11 // pred_fallthru
          _
        // Predicated region
        $region45: #{tpu_custom_call.1} parent=11 // pred_check
          %p700 = pneg %p278
        $region46: #{tpu_custom_call.1} parent=11 // pred_check_branch
          %702 = sbr.rel (%p700) target = $region48
        $region47: #{tpu_custom_call.1} parent=11 // pred_region
          _
        $region48: #{tpu_custom_call.1} parent=11 // pred_fallthru
          _
        // Predicated region
        $region49: #{tpu_custom_call.1} parent=11 // pred_check
          %p703 = pneg %p299
        $region50: #{tpu_custom_call.1} parent=11 // pred_check_branch
          %705 = sbr.rel (%p703) target = $region52
        $region51: #{tpu_custom_call.1} parent=11 // pred_region
          _
        $region52: #{tpu_custom_call.1} parent=11 // pred_fallthru
          _
        // Predicated region
        $region53: #{tpu_custom_call.1} parent=11 // pred_check
          %p706 = pneg %p320
        $region54: #{tpu_custom_call.1} parent=11 // pred_check_branch
          %708 = sbr.rel (%p706) target = $region56
        $region55: #{tpu_custom_call.1} parent=11 // pred_region
          _
        $region56: #{tpu_custom_call.1} parent=11 // pred_fallthru
          _
        // Predicated region
        $region57: #{tpu_custom_call.1} parent=11 // pred_check
          %p709 = pneg %p341
        $region58: #{tpu_custom_call.1} parent=11 // pred_check_branch
          %711 = sbr.rel (%p709) target = $region60
        $region59: #{tpu_custom_call.1} parent=11 // pred_region
          _
        $region60: #{tpu_custom_call.1} parent=11 // pred_fallthru
          _
        // Predicated region
        $region61: #{tpu_custom_call.1} parent=11 // pred_check
          %p712 = pneg %p362
        $region62: #{tpu_custom_call.1} parent=11 // pred_check_branch
          %714 = sbr.rel (%p712) target = $region64
        $region63: #{tpu_custom_call.1} parent=11 // pred_region
          _
        $region64: #{tpu_custom_call.1} parent=11 // pred_fallthru
          _
        // Predicated region
        $region65: #{tpu_custom_call.1} parent=11 // pred_check
          %p715 = pneg %p383
        $region66: #{tpu_custom_call.1} parent=11 // pred_check_branch
          %717 = sbr.rel (%p715) target = $region68
        $region67: #{tpu_custom_call.1} parent=11 // pred_region
          _
        $region68: #{tpu_custom_call.1} parent=11 // pred_fallthru
          _
        // Predicated region
        $region69: #{tpu_custom_call.1} parent=11 // pred_check
          %p718 = pneg %p404
        $region70: #{tpu_custom_call.1} parent=11 // pred_check_branch
          %720 = sbr.rel (%p718) target = $region72
        $region71: #{tpu_custom_call.1} parent=11 // pred_region
          _
        $region72: #{tpu_custom_call.1} parent=11 // pred_fallthru
          _
        // Predicated region
        $region73: #{tpu_custom_call.1} parent=11 // pred_check
          %p721 = pneg %p425
        $region74: #{tpu_custom_call.1} parent=11 // pred_check_branch
          %723 = sbr.rel (%p721) target = $region76
        $region75: #{tpu_custom_call.1} parent=11 // pred_region
          _
        $region76: #{tpu_custom_call.1} parent=11 // pred_fallthru
          _
        // Predicated region
        $region77: #{tpu_custom_call.1} parent=11 // pred_check
          %p724 = pneg %p446
        $region78: #{tpu_custom_call.1} parent=11 // pred_check_branch
          %726 = sbr.rel (%p724) target = $region80
        $region79: #{tpu_custom_call.1} parent=11 // pred_region
          _
        $region80: #{tpu_custom_call.1} parent=11 // pred_fallthru
          _
        // Predicated region
        $region81: #{tpu_custom_call.1} parent=11 // pred_check
          %p727 = pneg %p467
        $region82: #{tpu_custom_call.1} parent=11 // pred_check_branch
          %729 = sbr.rel (%p727) target = $region84
        $region83: #{tpu_custom_call.1} parent=11 // pred_region
          _
        $region84: #{tpu_custom_call.1} parent=11 // pred_fallthru
          _
        // Predicated region
        $region85: #{tpu_custom_call.1} parent=11 // pred_check
          %p730 = pneg %p488
        $region86: #{tpu_custom_call.1} parent=11 // pred_check_branch
          %732 = sbr.rel (%p730) target = $region88
        $region87: #{tpu_custom_call.1} parent=11 // pred_region
          _
        $region88: #{tpu_custom_call.1} parent=11 // pred_fallthru
          _
        // Predicated region
        $region89: #{tpu_custom_call.1} parent=11 // pred_check
          %p733 = pneg %p509
        $region90: #{tpu_custom_call.1} parent=11 // pred_check_branch
          %735 = sbr.rel (%p733) target = $region92
        $region91: #{tpu_custom_call.1} parent=11 // pred_region
          _
        $region92: #{tpu_custom_call.1} parent=11 // pred_fallthru
          _
        // Predicated region
        $region93: #{tpu_custom_call.1} parent=11 // pred_check
          %p736 = pneg %p530
        $region94: #{tpu_custom_call.1} parent=11 // pred_check_branch
          %738 = sbr.rel (%p736) target = $region96
        $region95: #{tpu_custom_call.1} parent=11 // pred_region
          _
        $region96: #{tpu_custom_call.1} parent=11 // pred_fallthru
          _
        // Predicated region
        $region97: #{tpu_custom_call.1} parent=11 // pred_check
          %p739 = pneg %p551
        $region98: #{tpu_custom_call.1} parent=11 // pred_check_branch
          %741 = sbr.rel (%p739) target = $region100
        $region99: #{tpu_custom_call.1} parent=11 // pred_region
          _
        $region100: #{tpu_custom_call.1} parent=11 // pred_fallthru
          _
        // Predicated region
        $region101: #{tpu_custom_call.1} parent=11 // pred_check
          %p742 = pneg %p572
        $region102: #{tpu_custom_call.1} parent=11 // pred_check_branch
          %744 = sbr.rel (%p742) target = $region104
        $region103: #{tpu_custom_call.1} parent=11 // pred_region
          _
        $region104: #{tpu_custom_call.1} parent=11 // pred_fallthru
          _
        // Predicated region
        $region105: #{tpu_custom_call.1} parent=11 // pred_check
          %p745 = pneg %p593
        $region106: #{tpu_custom_call.1} parent=11 // pred_check_branch
          %747 = sbr.rel (%p745) target = $region108
        $region107: #{tpu_custom_call.1} parent=11 // pred_region
          _
        $region108: #{tpu_custom_call.1} parent=11 // pred_fallthru
          _
        // Predicated region
        $region109: #{tpu_custom_call.1} parent=11 // pred_check
          %p748 = pneg %p614
        $region110: #{tpu_custom_call.1} parent=11 // pred_check_branch
          %750 = sbr.rel (%p748) target = $region112
        $region111: #{tpu_custom_call.1} parent=11 // pred_region
          _
        $region112: #{tpu_custom_call.1} parent=11 // pred_fallthru
          _
        // Predicated region
        $region113: #{tpu_custom_call.1} parent=11 // pred_check
          %p751 = pneg %p635
        $region114: #{tpu_custom_call.1} parent=11 // pred_check_branch
          %753 = sbr.rel (%p751) target = $region116
        $region115: #{tpu_custom_call.1} parent=11 // pred_region
          _
        $region116: #{tpu_custom_call.1} parent=11 // pred_fallthru
          _
      $region12: #{tpu_custom_call.1} parent=5 // pred_fallthru
        _
      %p754 = scmp.lt.s32.totalorder %s37, 2
      // Predicated region
      $region117: #{tpu_custom_call.1} parent=5 // pred_check
        %p755 = pneg %p754
      $region118: #{tpu_custom_call.1} parent=5 // pred_check_branch
        %757 = sbr.rel (%p755) target = $region120
      $region119: #{tpu_custom_call.1} parent=5 // pred_region
        // Predicated region
        $region121: #{tpu_custom_call.1} parent=119 // pred_check
          %p758 = pneg %p57
        $region122: #{tpu_custom_call.1} parent=119 // pred_check_branch
          %760 = sbr.rel (%p758) target = $region124
        $region123: #{tpu_custom_call.1} parent=119 // pred_region
          %p761 = scmp.lt.s32.totalorder %s37, 1
          %s762 = scalar_select %p761, %s37, 1
          %s763 = smul.addr %s762, 8
          %s764 = scalar_lea.vmem %s0, %s763
        $region124: #{tpu_custom_call.1} parent=119 // pred_fallthru
          _
        // Predicated region
        $region125: #{tpu_custom_call.1} parent=119 // pred_check
          %p765 = pneg %p83
        $region126: #{tpu_custom_call.1} parent=119 // pred_check_branch
          %767 = sbr.rel (%p765) target = $region128
        $region127: #{tpu_custom_call.1} parent=119 // pred_region
          %p768 = scmp.lt.s32.totalorder %s37, 1
          %s769 = scalar_select %p768, %s37, 1
          %s770 = smul.addr %s769, 8
          %s771 = scalar_lea.vmem %s1, %s770
        $region128: #{tpu_custom_call.1} parent=119 // pred_fallthru
          _
      $region120: #{tpu_custom_call.1} parent=5 // pred_fallthru
        _
      %p772 = scmp.le.s32.totalorder 1, %s37
      %p773 = scmp.lt.s32.totalorder %s37, 3
      %p774 = pnand %p772, %p773
      %p775 = pneg %p774
      // Predicated region
      $region129: #{tpu_custom_call.1} parent=5 // pred_check
        _
      $region130: #{tpu_custom_call.1} parent=5 // pred_check_branch
        %777 = sbr.rel (%p774) target = $region132
      $region131: #{tpu_custom_call.1} parent=5 // pred_region
        %s778 = ssub.s32 %s37, 1
        %p779 = scmp.lt.s32.totalorder %s42, 1
        %s780 = scalar_select %p779, %s42, 1
        %s781 = smul.addr %s780, 8
        %s782 = scalar_lea.vmem %s0, %s781
        %p783 = pneg %p63
        %p784 = pneg %p60
        %p785 = scmp.lt.s32.totalorder %s42, 1
        %s786 = scalar_select %p785, %s42, 1
        %s787 = smul.addr %s786, 8
        %s788 = scalar_lea.vmem %s1, %s787
        %p789 = pneg %p89
        %p790 = pneg %p86
        %p791 = pneg %p110
        %p792 = pneg %p107
        %p793 = pneg %p131
        %p794 = pneg %p128
        %p795 = pneg %p152
        %p796 = pneg %p149
        %p797 = pneg %p173
        %p798 = pneg %p170
        %p799 = pneg %p194
        %p800 = pneg %p191
        %p801 = pneg %p215
        %p802 = pneg %p212
        %p803 = pneg %p236
        %p804 = pneg %p233
        %p805 = pneg %p257
        %p806 = pneg %p254
        %p807 = pneg %p278
        %p808 = pneg %p275
        %p809 = pneg %p299
        %p810 = pneg %p296
        %p811 = pneg %p320
        %p812 = pneg %p317
        %p813 = pneg %p341
        %p814 = pneg %p338
        %p815 = pneg %p362
        %p816 = pneg %p359
        %p817 = pneg %p383
        %p818 = pneg %p380
        %p819 = pneg %p404
        %p820 = pneg %p401
        %p821 = pneg %p425
        %p822 = pneg %p422
        %p823 = pneg %p446
        %p824 = pneg %p443
        %p825 = pneg %p467
        %p826 = pneg %p464
        %p827 = pneg %p488
        %p828 = pneg %p485
        %p829 = pneg %p509
        %p830 = pneg %p506
        %p831 = pneg %p530
        %p832 = pneg %p527
        %p833 = pneg %p551
        %p834 = pneg %p548
        %p835 = pneg %p572
        %p836 = pneg %p569
        %p837 = pneg %p593
        %p838 = pneg %p590
        %p839 = pneg %p614
        %p840 = pneg %p611
        %p841 = pneg %p635
        %p842 = pneg %p632
        %p843 = pneg %p661
        %p844 = pneg %p658
        %s845 = sand.u32 %s648, 1
        %s846 = scalar_lea.sflag [#allocation3], %s845
        %s847 = sand.u32 %s648, 1
        %s848 = smul.addr %s847, 8
        %s849 = scalar_lea.vmem [#allocation2], %s848
        %p850 = scmp.lt.s32.totalorder %s42, 1
        %s851 = scalar_select %p850, %s42, 1
        %s852 = smul.addr %s851, 8
        %s853 = scalar_lea.vmem %s0, %s852
        %p854 = scmp.lt.s32.totalorder %s42, 1
        %s855 = scalar_select %p854, %s42, 1
        %s856 = smul.addr %s855, 8
        %s857 = scalar_lea.vmem %s1, %s856
        %v859 = vld [vmem:[%s853] sm:$0xff]
        %v860 = vld [vmem:[%s857] sm:$0xff]
        %v861 = vld [vmem:[%s2] sm:$0xff]
        %v862 = vld [vmem:[%s2 + $0x8] sm:$0xff]
        %v863 = vld [vmem:[%s2 + $0x10] sm:$0xff]
        %v864 = vld [vmem:[%s2 + $0x18] sm:$0xff]
        %v865 = vld [vmem:[%s2 + $0x20] sm:$0xff]
        %v866 = vld [vmem:[%s2 + $0x28] sm:$0xff]
        %v867 = vld [vmem:[%s2 + $0x30] sm:$0xff]
        %v868 = vld [vmem:[%s2 + $0x38] sm:$0xff]
        %v869 = vld [vmem:[%s2 + $0x40] sm:$0xff]
        %v870 = vld [vmem:[%s2 + $0x48] sm:$0xff]
        %v871 = vld [vmem:[%s2 + $0x50] sm:$0xff]
        %v872 = vld [vmem:[%s2 + $0x58] sm:$0xff]
        %v873 = vld [vmem:[%s2 + $0x60] sm:$0xff]
        %v874 = vld [vmem:[%s2 + $0x68] sm:$0xff]
        %v875 = vld [vmem:[%s2 + $0x70] sm:$0xff]
        %v876 = vld [vmem:[%s2 + $0x78] sm:$0xff]
        %v877 = vld [vmem:[%s3] sm:$0x1]
        %v878 = vld [vmem:[%s3 + $0x1] sm:$0x1]
        %v879 = vld [vmem:[%s3 + $0x2] sm:$0x1]
        %v880 = vld [vmem:[%s3 + $0x3] sm:$0x1]
        %v881 = vld [vmem:[%s4] sm:$0xff]
        %v882 = vld [vmem:[%s4 + $0x8] sm:$0xff]
        %v883 = vld [vmem:[%s4 + $0x10] sm:$0xff]
        %v884 = vld [vmem:[%s4 + $0x18] sm:$0xff]
        %v885 = vld [vmem:[%s4 + $0x20] sm:$0xff]
        %v886 = vld [vmem:[%s4 + $0x28] sm:$0xff]
        %v887 = vld [vmem:[%s4 + $0x30] sm:$0xff]
        %v888 = vld [vmem:[%s4 + $0x38] sm:$0xff]
        %v889 = vld [vmem:[%s4 + $0x40] sm:$0xff]
        %v890 = vld [vmem:[%s4 + $0x48] sm:$0xff]
        %v891 = vld [vmem:[%s4 + $0x50] sm:$0xff]
        %v892 = vld [vmem:[%s4 + $0x58] sm:$0xff]
        %v893 = vld [vmem:[%s4 + $0x60] sm:$0xff]
        %v894 = vld [vmem:[%s4 + $0x68] sm:$0xff]
        %v895 = vld [vmem:[%s4 + $0x70] sm:$0xff]
        %v896 = vld [vmem:[%s4 + $0x78] sm:$0xff]
        %v897 = vld [vmem:[%s5] sm:$0x1]
        %v898 = vld [vmem:[%s5 + $0x1] sm:$0x1]
        %v899 = vld [vmem:[%s5 + $0x2] sm:$0x1]
        %v900 = vld [vmem:[%s5 + $0x3] sm:$0x1]
        %v901 = vld [vmem:[%s6] sm:$0xff]
        %v902 = vld [vmem:[%s6 + $0x8] sm:$0xff]
        %v903 = vld [vmem:[%s6 + $0x10] sm:$0xff]
        %v904 = vld [vmem:[%s6 + $0x18] sm:$0xff]
        %v905 = vld [vmem:[%s6 + $0x20] sm:$0xff]
        %v906 = vld [vmem:[%s6 + $0x28] sm:$0xff]
        %v907 = vld [vmem:[%s6 + $0x30] sm:$0xff]
        %v908 = vld [vmem:[%s6 + $0x38] sm:$0xff]
        %v909 = vld [vmem:[%s6 + $0x40] sm:$0xff]
        %v910 = vld [vmem:[%s6 + $0x48] sm:$0xff]
        %v911 = vld [vmem:[%s6 + $0x50] sm:$0xff]
        %v912 = vld [vmem:[%s6 + $0x58] sm:$0xff]
        %v913 = vld [vmem:[%s6 + $0x60] sm:$0xff]
        %v914 = vld [vmem:[%s6 + $0x68] sm:$0xff]
        %v915 = vld [vmem:[%s6 + $0x70] sm:$0xff]
        %v916 = vld [vmem:[%s6 + $0x78] sm:$0xff]
        %v917 = vld [vmem:[%s7] sm:$0x1]
        %v918 = vld [vmem:[%s7 + $0x1] sm:$0x1]
        %v919 = vld [vmem:[%s7 + $0x2] sm:$0x1]
        %v920 = vld [vmem:[%s7 + $0x3] sm:$0x1]
        %v921 = vld [vmem:[%s8] sm:$0xff]
        %v922 = vld [vmem:[%s8 + $0x8] sm:$0xff]
        %v923 = vld [vmem:[%s8 + $0x10] sm:$0xff]
        %v924 = vld [vmem:[%s8 + $0x18] sm:$0xff]
        %v925 = vld [vmem:[%s9] sm:$0x1]
        %v926 = vpack.c.bf16 %v859, %v859
        %v927 = vpack.c.bf16 %v861, %v861
        %v928 = vpack.c.bf16 %v862, %v862
        %v929 = vpack.c.bf16 %v863, %v863
        %v930 = vpack.c.bf16 %v864, %v864
        %v931 = vpack.c.bf16 %v865, %v865
        %v932 = vpack.c.bf16 %v866, %v866
        %v933 = vpack.c.bf16 %v867, %v867
        %v934 = vpack.c.bf16 %v868, %v868
        %v935 = vpack.c.bf16 %v869, %v869
        %v936 = vpack.c.bf16 %v870, %v870
        %v937 = vpack.c.bf16 %v871, %v871
        %v938 = vpack.c.bf16 %v872, %v872
        %v939 = vpack.c.bf16 %v873, %v873
        %v940 = vpack.c.bf16 %v874, %v874
        %v941 = vpack.c.bf16 %v875, %v875
        %v942 = vpack.c.bf16 %v876, %v876
        %v947 = vperm.slane %v877, 0
        %v948 = vperm.slane %v878, 0
        %v949 = vperm.slane %v879, 0
        %v950 = vperm.slane %v880, 0
        %v959 = vunpack.c.l.b16 %v927
        %v960 = vunpack.c.l.b16 %v928
        %v961 = vunpack.c.l.b16 %v929
        %v962 = vunpack.c.l.b16 %v930
        %v963 = vpack.c.b16 %v960, %v959
        %v964 = vpack.c.b16 %v962, %v961
        %vm967 = vcmask 261120
        %v969 = vsel %vm967, %v926, 0
        %971 = vmatpush.bf16.msra.mxu0 0
        %972 = vmatpush.bf16.msra.mxu0 0
        %973 = vmatpush.bf16.msra.mxu0 0
        %974 = vmatpush.bf16.msra.mxu0 0
        %975 = vmatpush.bf16.msra.mxu0 0
        %976 = vmatpush.bf16.msra.mxu0 0
        %977 = vmatpush.bf16.msra.mxu0 %v964
        %978 = vmatpush.bf16.msra.mxu0 %v963
        %979 = vmatmul.bf16.gmra.mxu0 %v969
        %v980 = vpop.f32.mrf.mxu0
        %v981 = vadd.f32 %v947, %v980
        %v982 = vpop.f32.mrf.mxu0
        %983 = vdwg.mxu0
        %v988 = vunpack.c.l.b16 %v931
        %v989 = vunpack.c.l.b16 %v932
        %v990 = vunpack.c.l.b16 %v933
        %v991 = vunpack.c.l.b16 %v934
        %v992 = vpack.c.b16 %v989, %v988
        %v993 = vpack.c.b16 %v991, %v990
        %996 = vmatpush.bf16.msra.mxu0 0
        %997 = vmatpush.bf16.msra.mxu0 0
        %998 = vmatpush.bf16.msra.mxu0 0
        %999 = vmatpush.bf16.msra.mxu0 0
        %1000 = vmatpush.bf16.msra.mxu0 0
        %1001 = vmatpush.bf16.msra.mxu0 0
        %1002 = vmatpush.bf16.msra.mxu0 %v993
        %1003 = vmatpush.bf16.msra.mxu0 %v992
        %1004 = vmatmul.bf16.gmra.mxu0 %v969
        %v1005 = vpop.f32.mrf.mxu0
        %v1006 = vadd.f32 %v948, %v1005
        %v1007 = vpop.f32.mrf.mxu0
        %1008 = vdwg.mxu0
        %v1013 = vunpack.c.l.b16 %v935
        %v1014 = vunpack.c.l.b16 %v936
        %v1015 = vunpack.c.l.b16 %v937
        %v1016 = vunpack.c.l.b16 %v938
        %v1017 = vpack.c.b16 %v1014, %v1013
        %v1018 = vpack.c.b16 %v1016, %v1015
        %1021 = vmatpush.bf16.msra.mxu0 0
        %1022 = vmatpush.bf16.msra.mxu0 0
        %1023 = vmatpush.bf16.msra.mxu0 0
        %1024 = vmatpush.bf16.msra.mxu0 0
        %1025 = vmatpush.bf16.msra.mxu0 0
        %1026 = vmatpush.bf16.msra.mxu0 0
        %1027 = vmatpush.bf16.msra.mxu0 %v1018
        %1028 = vmatpush.bf16.msra.mxu0 %v1017
        %1029 = vmatmul.bf16.gmra.mxu0 %v969
        %v1030 = vpop.f32.mrf.mxu0
        %v1031 = vadd.f32 %v949, %v1030
        %v1032 = vpop.f32.mrf.mxu0
        %1033 = vdwg.mxu0
        %v1038 = vunpack.c.l.b16 %v939
        %v1039 = vunpack.c.l.b16 %v940
        %v1040 = vunpack.c.l.b16 %v941
        %v1041 = vunpack.c.l.b16 %v942
        %v1042 = vpack.c.b16 %v1039, %v1038
        %v1043 = vpack.c.b16 %v1041, %v1040
        %1046 = vmatpush.bf16.msra.mxu0 0
        %1047 = vmatpush.bf16.msra.mxu0 0
        %1048 = vmatpush.bf16.msra.mxu0 0
        %1049 = vmatpush.bf16.msra.mxu0 0
        %1050 = vmatpush.bf16.msra.mxu0 0
        %1051 = vmatpush.bf16.msra.mxu0 0
        %1052 = vmatpush.bf16.msra.mxu0 %v1043
        %1053 = vmatpush.bf16.msra.mxu0 %v1042
        %1054 = vmatmul.bf16.gmra.mxu0 %v969
        %v1055 = vpop.f32.mrf.mxu0
        %v1056 = vadd.f32 %v950, %v1055
        %v1057 = vpop.f32.mrf.mxu0
        %1058 = vdwg.mxu0
        %v1059 = vpack.c.bf16 %v881, %v881
        %v1060 = vpack.c.bf16 %v882, %v882
        %v1061 = vpack.c.bf16 %v883, %v883
        %v1062 = vpack.c.bf16 %v884, %v884
        %v1063 = vpack.c.bf16 %v885, %v885
        %v1064 = vpack.c.bf16 %v886, %v886
        %v1065 = vpack.c.bf16 %v887, %v887
        %v1066 = vpack.c.bf16 %v888, %v888
        %v1067 = vpack.c.bf16 %v889, %v889
        %v1068 = vpack.c.bf16 %v890, %v890
        %v1069 = vpack.c.bf16 %v891, %v891
        %v1070 = vpack.c.bf16 %v892, %v892
        %v1071 = vpack.c.bf16 %v893, %v893
        %v1072 = vpack.c.bf16 %v894, %v894
        %v1073 = vpack.c.bf16 %v895, %v895
        %v1074 = vpack.c.bf16 %v896, %v896
        %v1079 = vperm.slane %v897, 0
        %v1080 = vperm.slane %v898, 0
        %v1081 = vperm.slane %v899, 0
        %v1082 = vperm.slane %v900, 0
        %v1091 = vunpack.c.l.b16 %v1059
        %v1092 = vunpack.c.l.b16 %v1060
        %v1093 = vunpack.c.l.b16 %v1061
        %v1094 = vunpack.c.l.b16 %v1062
        %v1095 = vpack.c.b16 %v1092, %v1091
        %v1096 = vpack.c.b16 %v1094, %v1093
        %1099 = vmatpush.bf16.msra.mxu0 0
        %1100 = vmatpush.bf16.msra.mxu0 0
        %1101 = vmatpush.bf16.msra.mxu0 0
        %1102 = vmatpush.bf16.msra.mxu0 0
        %1103 = vmatpush.bf16.msra.mxu0 0
        %1104 = vmatpush.bf16.msra.mxu0 0
        %1105 = vmatpush.bf16.msra.mxu0 %v1096
        %1106 = vmatpush.bf16.msra.mxu0 %v1095
        %1107 = vmatmul.bf16.gmra.mxu0 %v969
        %v1108 = vpop.f32.mrf.mxu0
        %v1109 = vadd.f32 %v1079, %v1108
        %v1110 = vpop.f32.mrf.mxu0
        %1111 = vdwg.mxu0
        %v1116 = vunpack.c.l.b16 %v1063
        %v1117 = vunpack.c.l.b16 %v1064
        %v1118 = vunpack.c.l.b16 %v1065
        %v1119 = vunpack.c.l.b16 %v1066
        %v1120 = vpack.c.b16 %v1117, %v1116
        %v1121 = vpack.c.b16 %v1119, %v1118
        %1124 = vmatpush.bf16.msra.mxu0 0
        %1125 = vmatpush.bf16.msra.mxu0 0
        %1126 = vmatpush.bf16.msra.mxu0 0
        %1127 = vmatpush.bf16.msra.mxu0 0
        %1128 = vmatpush.bf16.msra.mxu0 0
        %1129 = vmatpush.bf16.msra.mxu0 0
        %1130 = vmatpush.bf16.msra.mxu0 %v1121
        %1131 = vmatpush.bf16.msra.mxu0 %v1120
        %1132 = vmatmul.bf16.gmra.mxu0 %v969
        %v1133 = vpop.f32.mrf.mxu0
        %v1134 = vadd.f32 %v1080, %v1133
        %v1135 = vpop.f32.mrf.mxu0
        %1136 = vdwg.mxu0
        %v1141 = vunpack.c.l.b16 %v1067
        %v1142 = vunpack.c.l.b16 %v1068
        %v1143 = vunpack.c.l.b16 %v1069
        %v1144 = vunpack.c.l.b16 %v1070
        %v1145 = vpack.c.b16 %v1142, %v1141
        %v1146 = vpack.c.b16 %v1144, %v1143
        %1149 = vmatpush.bf16.msra.mxu0 0
        %1150 = vmatpush.bf16.msra.mxu0 0
        %1151 = vmatpush.bf16.msra.mxu0 0
        %1152 = vmatpush.bf16.msra.mxu0 0
        %1153 = vmatpush.bf16.msra.mxu0 0
        %1154 = vmatpush.bf16.msra.mxu0 0
        %1155 = vmatpush.bf16.msra.mxu0 %v1146
        %1156 = vmatpush.bf16.msra.mxu0 %v1145
        %1157 = vmatmul.bf16.gmra.mxu0 %v969
        %v1158 = vpop.f32.mrf.mxu0
        %v1159 = vadd.f32 %v1081, %v1158
        %v1160 = vpop.f32.mrf.mxu0
        %1161 = vdwg.mxu0
        %v1166 = vunpack.c.l.b16 %v1071
        %v1167 = vunpack.c.l.b16 %v1072
        %v1168 = vunpack.c.l.b16 %v1073
        %v1169 = vunpack.c.l.b16 %v1074
        %v1170 = vpack.c.b16 %v1167, %v1166
        %v1171 = vpack.c.b16 %v1169, %v1168
        %1174 = vmatpush.bf16.msra.mxu0 0
        %1175 = vmatpush.bf16.msra.mxu0 0
        %1176 = vmatpush.bf16.msra.mxu0 0
        %1177 = vmatpush.bf16.msra.mxu0 0
        %1178 = vmatpush.bf16.msra.mxu0 0
        %1179 = vmatpush.bf16.msra.mxu0 0
        %1180 = vmatpush.bf16.msra.mxu0 %v1171
        %1181 = vmatpush.bf16.msra.mxu0 %v1170
        %1182 = vmatmul.bf16.gmra.mxu0 %v969
        %v1183 = vpop.f32.mrf.mxu0
        %v1184 = vadd.f32 %v1082, %v1183
        %v1185 = vpop.f32.mrf.mxu0
        %1186 = vdwg.mxu0
        %v1187 = vpack.c.bf16 %v901, %v901
        %v1188 = vpack.c.bf16 %v902, %v902
        %v1189 = vpack.c.bf16 %v903, %v903
        %v1190 = vpack.c.bf16 %v904, %v904
        %v1191 = vpack.c.bf16 %v905, %v905
        %v1192 = vpack.c.bf16 %v906, %v906
        %v1193 = vpack.c.bf16 %v907, %v907
        %v1194 = vpack.c.bf16 %v908, %v908
        %v1195 = vpack.c.bf16 %v909, %v909
        %v1196 = vpack.c.bf16 %v910, %v910
        %v1197 = vpack.c.bf16 %v911, %v911
        %v1198 = vpack.c.bf16 %v912, %v912
        %v1199 = vpack.c.bf16 %v913, %v913
        %v1200 = vpack.c.bf16 %v914, %v914
        %v1201 = vpack.c.bf16 %v915, %v915
        %v1202 = vpack.c.bf16 %v916, %v916
        %v1207 = vperm.slane %v917, 0
        %v1208 = vperm.slane %v918, 0
        %v1209 = vperm.slane %v919, 0
        %v1210 = vperm.slane %v920, 0
        %v1219 = vunpack.c.l.b16 %v1187
        %v1220 = vunpack.c.l.b16 %v1188
        %v1221 = vunpack.c.l.b16 %v1189
        %v1222 = vunpack.c.l.b16 %v1190
        %v1223 = vpack.c.b16 %v1220, %v1219
        %v1224 = vpack.c.b16 %v1222, %v1221
        %1227 = vmatpush.bf16.msra.mxu0 0
        %1228 = vmatpush.bf16.msra.mxu0 0
        %1229 = vmatpush.bf16.msra.mxu0 0
        %1230 = vmatpush.bf16.msra.mxu0 0
        %1231 = vmatpush.bf16.msra.mxu0 0
        %1232 = vmatpush.bf16.msra.mxu0 0
        %1233 = vmatpush.bf16.msra.mxu0 %v1224
        %1234 = vmatpush.bf16.msra.mxu0 %v1223
        %1235 = vmatmul.bf16.gmra.mxu0 %v969
        %v1236 = vpop.f32.mrf.mxu0
        %v1237 = vadd.f32 %v1207, %v1236
        %v1238 = vpop.f32.mrf.mxu0
        %1239 = vdwg.mxu0
        %v1244 = vunpack.c.l.b16 %v1191
        %v1245 = vunpack.c.l.b16 %v1192
        %v1246 = vunpack.c.l.b16 %v1193
        %v1247 = vunpack.c.l.b16 %v1194
        %v1248 = vpack.c.b16 %v1245, %v1244
        %v1249 = vpack.c.b16 %v1247, %v1246
        %1252 = vmatpush.bf16.msra.mxu0 0
        %1253 = vmatpush.bf16.msra.mxu0 0
        %1254 = vmatpush.bf16.msra.mxu0 0
        %1255 = vmatpush.bf16.msra.mxu0 0
        %1256 = vmatpush.bf16.msra.mxu0 0
        %1257 = vmatpush.bf16.msra.mxu0 0
        %1258 = vmatpush.bf16.msra.mxu0 %v1249
        %1259 = vmatpush.bf16.msra.mxu0 %v1248
        %1260 = vmatmul.bf16.gmra.mxu0 %v969
        %v1261 = vpop.f32.mrf.mxu0
        %v1262 = vadd.f32 %v1208, %v1261
        %v1263 = vpop.f32.mrf.mxu0
        %1264 = vdwg.mxu0
        %v1269 = vunpack.c.l.b16 %v1195
        %v1270 = vunpack.c.l.b16 %v1196
        %v1271 = vunpack.c.l.b16 %v1197
        %v1272 = vunpack.c.l.b16 %v1198
        %v1273 = vpack.c.b16 %v1270, %v1269
        %v1274 = vpack.c.b16 %v1272, %v1271
        %1277 = vmatpush.bf16.msra.mxu0 0
        %1278 = vmatpush.bf16.msra.mxu0 0
        %1279 = vmatpush.bf16.msra.mxu0 0
        %1280 = vmatpush.bf16.msra.mxu0 0
        %1281 = vmatpush.bf16.msra.mxu0 0
        %1282 = vmatpush.bf16.msra.mxu0 0
        %1283 = vmatpush.bf16.msra.mxu0 %v1274
        %1284 = vmatpush.bf16.msra.mxu0 %v1273
        %1285 = vmatmul.bf16.gmra.mxu0 %v969
        %v1286 = vpop.f32.mrf.mxu0
        %v1287 = vadd.f32 %v1209, %v1286
        %v1288 = vpop.f32.mrf.mxu0
        %1289 = vdwg.mxu0
        %v1294 = vunpack.c.l.b16 %v1199
        %v1295 = vunpack.c.l.b16 %v1200
        %v1296 = vunpack.c.l.b16 %v1201
        %v1297 = vunpack.c.l.b16 %v1202
        %v1298 = vpack.c.b16 %v1295, %v1294
        %v1299 = vpack.c.b16 %v1297, %v1296
        %1302 = vmatpush.bf16.msra.mxu0 0
        %1303 = vmatpush.bf16.msra.mxu0 0
        %1304 = vmatpush.bf16.msra.mxu0 0
        %1305 = vmatpush.bf16.msra.mxu0 0
        %1306 = vmatpush.bf16.msra.mxu0 0
        %1307 = vmatpush.bf16.msra.mxu0 0
        %1308 = vmatpush.bf16.msra.mxu0 %v1299
        %1309 = vmatpush.bf16.msra.mxu0 %v1298
        %1310 = vmatmul.bf16.gmra.mxu0 %v969
        %v1311 = vpop.f32.mrf.mxu0
        %v1312 = vadd.f32 %v1210, %v1311
        %v1313 = vpop.f32.mrf.mxu0
        %1314 = vdwg.mxu0
        %v1315 = vpack.c.bf16 %v981, %v981
        %v1316 = vpack.c.bf16 %v1006, %v1006
        %v1317 = vpack.c.bf16 %v1031, %v1031
        %v1318 = vpack.c.bf16 %v1056, %v1056
        %v1319 = vpack.c.bf16 %v1109, %v1109
        %v1320 = vpack.c.bf16 %v1134, %v1134
        %v1321 = vpack.c.bf16 %v1159, %v1159
        %v1322 = vpack.c.bf16 %v1184, %v1184
        %vm1323 = vcmask 64512
        %v1325 = vsel %vm1323, %v1315, 0
        %v1328 = vsel %vm1323, %v1319, 0
        %1330 = vmatpush.bf16.xpose.msra.mxu0 0
        %1331 = vmatpush.bf16.xpose.msra.mxu0 0
        %1332 = vmatpush.bf16.xpose.msra.mxu0 0
        %1333 = vmatpush.bf16.xpose.msra.mxu0 0
        %1334 = vmatpush.bf16.xpose.msra.mxu0 0
        %1335 = vmatpush.bf16.xpose.msra.mxu0 0
        %1336 = vmatpush.bf16.xpose.msra.mxu0 0
        %1337 = vmatpush.bf16.xpose.msra.mxu0 %v1328
        %1338 = vmatmul.bf16.gmra.mxu0 %v1325
        %v1339 = vpop.f32.mrf.mxu0
        %v1340 = vadd.f32 0.0, %v1339
        %v1341 = vpop.f32.mrf.mxu0
        %1342 = vdwg.mxu0
        %v1344 = vsel %vm1323, %v1316, 0
        %v1347 = vsel %vm1323, %v1320, 0
        %1349 = vmatpush.bf16.xpose.msra.mxu0 0
        %1350 = vmatpush.bf16.xpose.msra.mxu0 0
        %1351 = vmatpush.bf16.xpose.msra.mxu0 0
        %1352 = vmatpush.bf16.xpose.msra.mxu0 0
        %1353 = vmatpush.bf16.xpose.msra.mxu0 0
        %1354 = vmatpush.bf16.xpose.msra.mxu0 0
        %1355 = vmatpush.bf16.xpose.msra.mxu0 0
        %1356 = vmatpush.bf16.xpose.msra.mxu0 %v1347
        %1357 = vmatmul.bf16.gmra.mxu0 %v1344
        %v1358 = vpop.f32.mrf.mxu0
        %v1359 = vadd.f32 0.0, %v1358
        %v1360 = vpop.f32.mrf.mxu0
        %1361 = vdwg.mxu0
        %v1363 = vsel %vm1323, %v1317, 0
        %v1366 = vsel %vm1323, %v1321, 0
        %1368 = vmatpush.bf16.xpose.msra.mxu0 0
        %1369 = vmatpush.bf16.xpose.msra.mxu0 0
        %1370 = vmatpush.bf16.xpose.msra.mxu0 0
        %1371 = vmatpush.bf16.xpose.msra.mxu0 0
        %1372 = vmatpush.bf16.xpose.msra.mxu0 0
        %1373 = vmatpush.bf16.xpose.msra.mxu0 0
        %1374 = vmatpush.bf16.xpose.msra.mxu0 0
        %1375 = vmatpush.bf16.xpose.msra.mxu0 %v1366
        %1376 = vmatmul.bf16.gmra.mxu0 %v1363
        %v1377 = vpop.f32.mrf.mxu0
        %v1378 = vadd.f32 0.0, %v1377
        %v1379 = vpop.f32.mrf.mxu0
        %1380 = vdwg.mxu0
        %v1382 = vsel %vm1323, %v1318, 0
        %v1385 = vsel %vm1323, %v1322, 0
        %1387 = vmatpush.bf16.xpose.msra.mxu0 0
        %1388 = vmatpush.bf16.xpose.msra.mxu0 0
        %1389 = vmatpush.bf16.xpose.msra.mxu0 0
        %1390 = vmatpush.bf16.xpose.msra.mxu0 0
        %1391 = vmatpush.bf16.xpose.msra.mxu0 0
        %1392 = vmatpush.bf16.xpose.msra.mxu0 0
        %1393 = vmatpush.bf16.xpose.msra.mxu0 0
        %1394 = vmatpush.bf16.xpose.msra.mxu0 %v1385
        %1395 = vmatmul.bf16.gmra.mxu0 %v1382
        %v1396 = vpop.f32.mrf.mxu0
        %v1397 = vadd.f32 0.0, %v1396
        %v1398 = vpop.f32.mrf.mxu0
        %1399 = vdwg.mxu0
        %v1400 = vmul.f32 %v1340, 0.35355338
        %v1401 = vmul.f32 %v1359, 0.35355338
        %v1402 = vmul.f32 %v1378, 0.35355338
        %v1403 = vmul.f32 %v1397, 0.35355338
        %v1404 = vsel %vm1323, %v1400, -inf
        %1405 = vmax.xlane.f32.xlu0 %v1404
        %v1406 = vpop.xlane.xlu0 %1405
        %v1407 = vsel %vm1323, %v1401, -inf
        %1408 = vmax.xlane.f32.xlu0 %v1407
        %v1409 = vpop.xlane.xlu0 %1408
        %v1410 = vsel %vm1323, %v1402, -inf
        %1411 = vmax.xlane.f32.xlu0 %v1410
        %v1412 = vpop.xlane.xlu0 %1411
        %v1413 = vsel %vm1323, %v1403, -inf
        %1414 = vmax.xlane.f32.xlu0 %v1413
        %v1415 = vpop.xlane.xlu0 %1414
        %v1416 = vsub.f32 %v1400, %v1406
        %v1417 = vsub.f32 %v1401, %v1409
        %v1418 = vsub.f32 %v1402, %v1412
        %v1419 = vsub.f32 %v1403, %v1415
        %v1420 = vmul.f32 %v1416, 1.442695
        %v1421 = vpow.pop %v1420
        %v1422 = vmul.f32 %v1417, 1.442695
        %v1423 = vpow.pop %v1422
        %v1424 = vmul.f32 %v1418, 1.442695
        %v1425 = vpow.pop %v1424
        %v1426 = vmul.f32 %v1419, 1.442695
        %v1427 = vpow.pop %v1426
        %v1428 = vsel %vm1323, %v1421, 0.0
        %1429 = vadd.xlane.f32.xlu0 %v1428
        %v1430 = vpop.xlane.xlu0 %1429
        %v1431 = vsel %vm1323, %v1423, 0.0
        %1432 = vadd.xlane.f32.xlu0 %v1431
        %v1433 = vpop.xlane.xlu0 %1432
        %v1434 = vsel %vm1323, %v1425, 0.0
        %1435 = vadd.xlane.f32.xlu0 %v1434
        %v1436 = vpop.xlane.xlu0 %1435
        %v1437 = vsel %vm1323, %v1427, 0.0
        %1438 = vadd.xlane.f32.xlu0 %v1437
        %v1439 = vpop.xlane.xlu0 %1438
        %v1440 = vrcp.pop %v1430
        %v1441 = vrcp.pop %v1433
        %v1442 = vrcp.pop %v1436
        %v1443 = vrcp.pop %v1439
        %v1444 = vmul.f32 %v1421, %v1440
        %v1445 = vmul.f32 %v1423, %v1441
        %v1446 = vmul.f32 %v1425, %v1442
        %v1447 = vmul.f32 %v1427, %v1443
        %v1448 = vpack.c.bf16 %v1444, %v1444
        %v1449 = vpack.c.bf16 %v1445, %v1445
        %v1450 = vpack.c.bf16 %v1446, %v1446
        %v1451 = vpack.c.bf16 %v1447, %v1447
        %v1452 = vpack.c.bf16 %v1237, %v1237
        %v1453 = vpack.c.bf16 %v1262, %v1262
        %v1454 = vpack.c.bf16 %v1287, %v1287
        %v1455 = vpack.c.bf16 %v1312, %v1312
        %v1457 = vsel %vm1323, %v1448, 0
        %vm1459 = vcmask 1043456
        %v1461 = vsel %vm1459, %v1452, 0
        %1463 = vmatpush.bf16.msra.mxu0 0
        %1464 = vmatpush.bf16.msra.mxu0 0
        %1465 = vmatpush.bf16.msra.mxu0 0
        %1466 = vmatpush.bf16.msra.mxu0 0
        %1467 = vmatpush.bf16.msra.mxu0 0
        %1468 = vmatpush.bf16.msra.mxu0 0
        %1469 = vmatpush.bf16.msra.mxu0 0
        %1470 = vmatpush.bf16.msra.mxu0 %v1461
        %1471 = vmatmul.bf16.gmra.mxu0 %v1457
        %v1472 = vpop.f32.mrf.mxu0
        %v1473 = vadd.f32 0.0, %v1472
        %v1474 = vpop.f32.mrf.mxu0
        %1475 = vdwg.mxu0
        %v1477 = vsel %vm1323, %v1449, 0
        %v1480 = vsel %vm1459, %v1453, 0
        %1482 = vmatpush.bf16.msra.mxu0 0
        %1483 = vmatpush.bf16.msra.mxu0 0
        %1484 = vmatpush.bf16.msra.mxu0 0
        %1485 = vmatpush.bf16.msra.mxu0 0
        %1486 = vmatpush.bf16.msra.mxu0 0
        %1487 = vmatpush.bf16.msra.mxu0 0
        %1488 = vmatpush.bf16.msra.mxu0 0
        %1489 = vmatpush.bf16.msra.mxu0 %v1480
        %1490 = vmatmul.bf16.gmra.mxu0 %v1477
        %v1491 = vpop.f32.mrf.mxu0
        %v1492 = vadd.f32 0.0, %v1491
        %v1493 = vpop.f32.mrf.mxu0
        %1494 = vdwg.mxu0
        %v1496 = vsel %vm1323, %v1450, 0
        %v1499 = vsel %vm1459, %v1454, 0
        %1501 = vmatpush.bf16.msra.mxu0 0
        %1502 = vmatpush.bf16.msra.mxu0 0
        %1503 = vmatpush.bf16.msra.mxu0 0
        %1504 = vmatpush.bf16.msra.mxu0 0
        %1505 = vmatpush.bf16.msra.mxu0 0
        %1506 = vmatpush.bf16.msra.mxu0 0
        %1507 = vmatpush.bf16.msra.mxu0 0
        %1508 = vmatpush.bf16.msra.mxu0 %v1499
        %1509 = vmatmul.bf16.gmra.mxu0 %v1496
        %v1510 = vpop.f32.mrf.mxu0
        %v1511 = vadd.f32 0.0, %v1510
        %v1512 = vpop.f32.mrf.mxu0
        %1513 = vdwg.mxu0
        %v1515 = vsel %vm1323, %v1451, 0
        %v1518 = vsel %vm1459, %v1455, 0
        %1520 = vmatpush.bf16.msra.mxu0 0
        %1521 = vmatpush.bf16.msra.mxu0 0
        %1522 = vmatpush.bf16.msra.mxu0 0
        %1523 = vmatpush.bf16.msra.mxu0 0
        %1524 = vmatpush.bf16.msra.mxu0 0
        %1525 = vmatpush.bf16.msra.mxu0 0
        %1526 = vmatpush.bf16.msra.mxu0 0
        %1527 = vmatpush.bf16.msra.mxu0 %v1518
        %1528 = vmatmul.bf16.gmra.mxu0 %v1515
        %v1529 = vpop.f32.mrf.mxu0
        %v1530 = vadd.f32 0.0, %v1529
        %v1531 = vpop.f32.mrf.mxu0
        %1532 = vdwg.mxu0
        %v1533 = vpack.c.bf16 %v1473, %v1473
        %v1534 = vpack.c.bf16 %v1492, %v1492
        %v1535 = vpack.c.bf16 %v1511, %v1511
        %v1536 = vpack.c.bf16 %v1530, %v1530
        %v1537 = vpack.c.bf16 %v921, %v921
        %v1538 = vpack.c.bf16 %v922, %v922
        %v1539 = vpack.c.bf16 %v923, %v923
        %v1540 = vpack.c.bf16 %v924, %v924
        %v1542 = vsel %vm1323, %v1533, 0
        %v1545 = vsel %vm1459, %v1537, 0
        %1547 = vmatpush.bf16.msra.mxu0 0
        %1548 = vmatpush.bf16.msra.mxu0 0
        %1549 = vmatpush.bf16.msra.mxu0 0
        %1550 = vmatpush.bf16.msra.mxu0 0
        %1551 = vmatpush.bf16.msra.mxu0 0
        %1552 = vmatpush.bf16.msra.mxu0 0
        %1553 = vmatpush.bf16.msra.mxu0 0
        %1554 = vmatpush.bf16.msra.mxu0 %v1545
        %1555 = vmatmul.bf16.gmra.mxu0 %v1542
        %v1556 = vpop.f32.mrf.mxu0
        %v1557 = vadd.f32 0.0, %v1556
        %v1558 = vpop.f32.mrf.mxu0
        %1559 = vdwg.mxu0
        %v1561 = vsel %vm1323, %v1534, 0
        %v1564 = vsel %vm1459, %v1538, 0
        %1566 = vmatpush.bf16.msra.mxu0 0
        %1567 = vmatpush.bf16.msra.mxu0 0
        %1568 = vmatpush.bf16.msra.mxu0 0
        %1569 = vmatpush.bf16.msra.mxu0 0
        %1570 = vmatpush.bf16.msra.mxu0 0
        %1571 = vmatpush.bf16.msra.mxu0 0
        %1572 = vmatpush.bf16.msra.mxu0 0
        %1573 = vmatpush.bf16.msra.mxu0 %v1564
        %1574 = vmatmul.bf16.gmra.mxu0 %v1561
        %v1575 = vpop.f32.mrf.mxu0
        %v1576 = vadd.f32 0.0, %v1575
        %v1577 = vpop.f32.mrf.mxu0
        %1578 = vdwg.mxu0
        %v1580 = vsel %vm1323, %v1535, 0
        %v1583 = vsel %vm1459, %v1539, 0
        %1585 = vmatpush.bf16.msra.mxu0 0
        %1586 = vmatpush.bf16.msra.mxu0 0
        %1587 = vmatpush.bf16.msra.mxu0 0
        %1588 = vmatpush.bf16.msra.mxu0 0
        %1589 = vmatpush.bf16.msra.mxu0 0
        %1590 = vmatpush.bf16.msra.mxu0 0
        %1591 = vmatpush.bf16.msra.mxu0 0
        %1592 = vmatpush.bf16.msra.mxu0 %v1583
        %1593 = vmatmul.bf16.gmra.mxu0 %v1580
        %v1594 = vpop.f32.mrf.mxu0
        %v1595 = vadd.f32 0.0, %v1594
        %v1596 = vpop.f32.mrf.mxu0
        %1597 = vdwg.mxu0
        %v1599 = vsel %vm1323, %v1536, 0
        %v1602 = vsel %vm1459, %v1540, 0
        %1604 = vmatpush.bf16.msra.mxu0 0
        %1605 = vmatpush.bf16.msra.mxu0 0
        %1606 = vmatpush.bf16.msra.mxu0 0
        %1607 = vmatpush.bf16.msra.mxu0 0
        %1608 = vmatpush.bf16.msra.mxu0 0
        %1609 = vmatpush.bf16.msra.mxu0 0
        %1610 = vmatpush.bf16.msra.mxu0 0
        %1611 = vmatpush.bf16.msra.mxu0 %v1602
        %1612 = vmatmul.bf16.gmra.mxu0 %v1599
        %v1613 = vpop.f32.mrf.mxu0
        %v1614 = vadd.f32 0.0, %v1613
        %v1615 = vpop.f32.mrf.mxu0
        %1616 = vdwg.mxu0
        %v1617 = vsel %vm967, %v1557, 0.0
        %v1618 = vsel %vm967, %v1576, 0.0
        %v1619 = vadd.f32 %v1617, %v1618
        %v1620 = vsel %vm967, %v1595, 0.0
        %v1621 = vadd.f32 %v1619, %v1620
        %v1622 = vsel %vm967, %v1614, 0.0
        %v1623 = vadd.f32 %v1621, %v1622
        %v1625 = vperm.slane %v925, 0
        %v1627 = vadd.f32 %v1623, %v1625
        %v1628 = vld [vmem:[%s10] sm:$0x1]
        %v1629 = vld [vmem:[%s11] sm:$0x1]
        %v1630 = vsel %vm967, %v1627, 0.0
        %1631 = vadd.xlane.f32.xlu0 %v1630
        %v1632 = vpop.xlane.xlu0 %1631
        %v1633 = vrcp.pop 32.0
        %v1634 = vmul.f32 32.0, %v1633
        %v1635 = vsub.f32 1.0, %v1634
        %v1636 = vmul.f32 %v1633, %v1635
        %v1637 = vadd.f32 %v1633, %v1636
        %vm1638 = vweird.f32 %v1633
        %v1639 = vsel %vm1638, %v1633, %v1637
        %v1640 = vmul.f32 %v1632, %v1639
        %v1641 = vsub.f32 %v1627, %v1640
        %v1642 = vmul.f32 %v1641, %v1641
        %v1643 = vsel %vm967, %v1642, 0.0
        %1644 = vadd.xlane.f32.xlu0 %v1643
        %v1645 = vpop.xlane.xlu0 %1644
        %v1646 = vmul.f32 %v1645, %v1639
        %v1647 = vadd.f32 %v1646, 1e-05
        %v1648 = vrsqrt.pop %v1647
        %v1649 = vmul.f32 %v1648, %v1647
        %v1650 = vmul.f32 %v1649, %v1648
        %v1651 = vmul.f32 0.5, %v1650
        %v1652 = vsub.f32 1.5, %v1651
        %v1653 = vmul.f32 %v1648, %v1652
        %vm1654 = vweird.f32 %v1647
        %vm1655 = vweird.f32 %v1648
        %vm1656 = vmor %vm1654, %vm1655
        %v1657 = vsel %vm1656, %v1648, %v1653
        %v1658 = vmul.f32 %v1641, %v1657
        %v1660 = vperm.slane %v1628, 0
        %v1662 = vmul.f32 %v1658, %v1660
        %v1664 = vperm.slane %v1629, 0
        %v1666 = vadd.f32 %v1662, %v1664
        %v1667 = vadd.f32 %v859, %v1666
        %v1668 = vld [vmem:[%s12] sm:$0xff]
        %v1669 = vld [vmem:[%s12 + $0x8] sm:$0xff]
        %v1670 = vld [vmem:[%s12 + $0x10] sm:$0xff]
        %v1671 = vld [vmem:[%s12 + $0x18] sm:$0xff]
        %v1672 = vld [vmem:[%s12 + $0x20] sm:$0xff]
        %v1673 = vld [vmem:[%s12 + $0x28] sm:$0xff]
        %v1674 = vld [vmem:[%s12 + $0x30] sm:$0xff]
        %v1675 = vld [vmem:[%s12 + $0x38] sm:$0xff]
        %v1676 = vld [vmem:[%s12 + $0x40] sm:$0xff]
        %v1677 = vld [vmem:[%s12 + $0x48] sm:$0xff]
        %v1678 = vld [vmem:[%s12 + $0x50] sm:$0xff]
        %v1679 = vld [vmem:[%s12 + $0x58] sm:$0xff]
        %v1680 = vld [vmem:[%s12 + $0x60] sm:$0xff]
        %v1681 = vld [vmem:[%s12 + $0x68] sm:$0xff]
        %v1682 = vld [vmem:[%s12 + $0x70] sm:$0xff]
        %v1683 = vld [vmem:[%s12 + $0x78] sm:$0xff]
        %v1684 = vld [vmem:[%s13] sm:$0x1]
        %v1685 = vld [vmem:[%s13 + $0x1] sm:$0x1]
        %v1686 = vld [vmem:[%s13 + $0x2] sm:$0x1]
        %v1687 = vld [vmem:[%s13 + $0x3] sm:$0x1]
        %v1688 = vld [vmem:[%s14] sm:$0xff]
        %v1689 = vld [vmem:[%s14 + $0x8] sm:$0xff]
        %v1690 = vld [vmem:[%s14 + $0x10] sm:$0xff]
        %v1691 = vld [vmem:[%s14 + $0x18] sm:$0xff]
        %v1692 = vld [vmem:[%s14 + $0x20] sm:$0xff]
        %v1693 = vld [vmem:[%s14 + $0x28] sm:$0xff]
        %v1694 = vld [vmem:[%s14 + $0x30] sm:$0xff]
        %v1695 = vld [vmem:[%s14 + $0x38] sm:$0xff]
        %v1696 = vld [vmem:[%s14 + $0x40] sm:$0xff]
        %v1697 = vld [vmem:[%s14 + $0x48] sm:$0xff]
        %v1698 = vld [vmem:[%s14 + $0x50] sm:$0xff]
        %v1699 = vld [vmem:[%s14 + $0x58] sm:$0xff]
        %v1700 = vld [vmem:[%s14 + $0x60] sm:$0xff]
        %v1701 = vld [vmem:[%s14 + $0x68] sm:$0xff]
        %v1702 = vld [vmem:[%s14 + $0x70] sm:$0xff]
        %v1703 = vld [vmem:[%s14 + $0x78] sm:$0xff]
        %v1704 = vld [vmem:[%s15] sm:$0x1]
        %v1705 = vld [vmem:[%s15 + $0x1] sm:$0x1]
        %v1706 = vld [vmem:[%s15 + $0x2] sm:$0x1]
        %v1707 = vld [vmem:[%s15 + $0x3] sm:$0x1]
        %v1708 = vld [vmem:[%s16] sm:$0xff]
        %v1709 = vld [vmem:[%s16 + $0x8] sm:$0xff]
        %v1710 = vld [vmem:[%s16 + $0x10] sm:$0xff]
        %v1711 = vld [vmem:[%s16 + $0x18] sm:$0xff]
        %v1712 = vld [vmem:[%s16 + $0x20] sm:$0xff]
        %v1713 = vld [vmem:[%s16 + $0x28] sm:$0xff]
        %v1714 = vld [vmem:[%s16 + $0x30] sm:$0xff]
        %v1715 = vld [vmem:[%s16 + $0x38] sm:$0xff]
        %v1716 = vld [vmem:[%s16 + $0x40] sm:$0xff]
        %v1717 = vld [vmem:[%s16 + $0x48] sm:$0xff]
        %v1718 = vld [vmem:[%s16 + $0x50] sm:$0xff]
        %v1719 = vld [vmem:[%s16 + $0x58] sm:$0xff]
        %v1720 = vld [vmem:[%s16 + $0x60] sm:$0xff]
        %v1721 = vld [vmem:[%s16 + $0x68] sm:$0xff]
        %v1722 = vld [vmem:[%s16 + $0x70] sm:$0xff]
        %v1723 = vld [vmem:[%s16 + $0x78] sm:$0xff]
        %v1724 = vld [vmem:[%s17] sm:$0x1]
        %v1725 = vld [vmem:[%s17 + $0x1] sm:$0x1]
        %v1726 = vld [vmem:[%s17 + $0x2] sm:$0x1]
        %v1727 = vld [vmem:[%s17 + $0x3] sm:$0x1]
        %v1728 = vld [vmem:[%s18] sm:$0xff]
        %v1729 = vld [vmem:[%s18 + $0x8] sm:$0xff]
        %v1730 = vld [vmem:[%s18 + $0x10] sm:$0xff]
        %v1731 = vld [vmem:[%s18 + $0x18] sm:$0xff]
        %v1732 = vld [vmem:[%s19] sm:$0x1]
        %v1733 = vpack.c.bf16 %v1667, %v1667
        %v1734 = vpack.c.bf16 %v860, %v860
        %v1735 = vpack.c.bf16 %v1668, %v1668
        %v1736 = vpack.c.bf16 %v1669, %v1669
        %v1737 = vpack.c.bf16 %v1670, %v1670
        %v1738 = vpack.c.bf16 %v1671, %v1671
        %v1739 = vpack.c.bf16 %v1672, %v1672
        %v1740 = vpack.c.bf16 %v1673, %v1673
        %v1741 = vpack.c.bf16 %v1674, %v1674
        %v1742 = vpack.c.bf16 %v1675, %v1675
        %v1743 = vpack.c.bf16 %v1676, %v1676
        %v1744 = vpack.c.bf16 %v1677, %v1677
        %v1745 = vpack.c.bf16 %v1678, %v1678
        %v1746 = vpack.c.bf16 %v1679, %v1679
        %v1747 = vpack.c.bf16 %v1680, %v1680
        %v1748 = vpack.c.bf16 %v1681, %v1681
        %v1749 = vpack.c.bf16 %v1682, %v1682
        %v1750 = vpack.c.bf16 %v1683, %v1683
        %v1755 = vperm.slane %v1684, 0
        %v1756 = vperm.slane %v1685, 0
        %v1757 = vperm.slane %v1686, 0
        %v1758 = vperm.slane %v1687, 0
        %v1767 = vunpack.c.l.b16 %v1735
        %v1768 = vunpack.c.l.b16 %v1736
        %v1769 = vunpack.c.l.b16 %v1737
        %v1770 = vunpack.c.l.b16 %v1738
        %v1771 = vpack.c.b16 %v1768, %v1767
        %v1772 = vpack.c.b16 %v1770, %v1769
        %v1776 = vsel %vm967, %v1733, 0
        %1778 = vmatpush.bf16.msra.mxu0 0
        %1779 = vmatpush.bf16.msra.mxu0 0
        %1780 = vmatpush.bf16.msra.mxu0 0
        %1781 = vmatpush.bf16.msra.mxu0 0
        %1782 = vmatpush.bf16.msra.mxu0 0
        %1783 = vmatpush.bf16.msra.mxu0 0
        %1784 = vmatpush.bf16.msra.mxu0 %v1772
        %1785 = vmatpush.bf16.msra.mxu0 %v1771
        %1786 = vmatmul.bf16.gmra.mxu0 %v1776
        %v1787 = vpop.f32.mrf.mxu0
        %v1788 = vadd.f32 %v1755, %v1787
        %v1789 = vpop.f32.mrf.mxu0
        %1790 = vdwg.mxu0
        %v1795 = vunpack.c.l.b16 %v1739
        %v1796 = vunpack.c.l.b16 %v1740
        %v1797 = vunpack.c.l.b16 %v1741
        %v1798 = vunpack.c.l.b16 %v1742
        %v1799 = vpack.c.b16 %v1796, %v1795
        %v1800 = vpack.c.b16 %v1798, %v1797
        %1803 = vmatpush.bf16.msra.mxu0 0
        %1804 = vmatpush.bf16.msra.mxu0 0
        %1805 = vmatpush.bf16.msra.mxu0 0
        %1806 = vmatpush.bf16.msra.mxu0 0
        %1807 = vmatpush.bf16.msra.mxu0 0
        %1808 = vmatpush.bf16.msra.mxu0 0
        %1809 = vmatpush.bf16.msra.mxu0 %v1800
        %1810 = vmatpush.bf16.msra.mxu0 %v1799
        %1811 = vmatmul.bf16.gmra.mxu0 %v1776
        %v1812 = vpop.f32.mrf.mxu0
        %v1813 = vadd.f32 %v1756, %v1812
        %v1814 = vpop.f32.mrf.mxu0
        %1815 = vdwg.mxu0
        %v1820 = vunpack.c.l.b16 %v1743
        %v1821 = vunpack.c.l.b16 %v1744
        %v1822 = vunpack.c.l.b16 %v1745
        %v1823 = vunpack.c.l.b16 %v1746
        %v1824 = vpack.c.b16 %v1821, %v1820
        %v1825 = vpack.c.b16 %v1823, %v1822
        %1828 = vmatpush.bf16.msra.mxu0 0
        %1829 = vmatpush.bf16.msra.mxu0 0
        %1830 = vmatpush.bf16.msra.mxu0 0
        %1831 = vmatpush.bf16.msra.mxu0 0
        %1832 = vmatpush.bf16.msra.mxu0 0
        %1833 = vmatpush.bf16.msra.mxu0 0
        %1834 = vmatpush.bf16.msra.mxu0 %v1825
        %1835 = vmatpush.bf16.msra.mxu0 %v1824
        %1836 = vmatmul.bf16.gmra.mxu0 %v1776
        %v1837 = vpop.f32.mrf.mxu0
        %v1838 = vadd.f32 %v1757, %v1837
        %v1839 = vpop.f32.mrf.mxu0
        %1840 = vdwg.mxu0
        %v1845 = vunpack.c.l.b16 %v1747
        %v1846 = vunpack.c.l.b16 %v1748
        %v1847 = vunpack.c.l.b16 %v1749
        %v1848 = vunpack.c.l.b16 %v1750
        %v1849 = vpack.c.b16 %v1846, %v1845
        %v1850 = vpack.c.b16 %v1848, %v1847
        %1853 = vmatpush.bf16.msra.mxu0 0
        %1854 = vmatpush.bf16.msra.mxu0 0
        %1855 = vmatpush.bf16.msra.mxu0 0
        %1856 = vmatpush.bf16.msra.mxu0 0
        %1857 = vmatpush.bf16.msra.mxu0 0
        %1858 = vmatpush.bf16.msra.mxu0 0
        %1859 = vmatpush.bf16.msra.mxu0 %v1850
        %1860 = vmatpush.bf16.msra.mxu0 %v1849
        %1861 = vmatmul.bf16.gmra.mxu0 %v1776
        %v1862 = vpop.f32.mrf.mxu0
        %v1863 = vadd.f32 %v1758, %v1862
        %v1864 = vpop.f32.mrf.mxu0
        %1865 = vdwg.mxu0
        %v1866 = vpack.c.bf16 %v1688, %v1688
        %v1867 = vpack.c.bf16 %v1689, %v1689
        %v1868 = vpack.c.bf16 %v1690, %v1690
        %v1869 = vpack.c.bf16 %v1691, %v1691
        %v1870 = vpack.c.bf16 %v1692, %v1692
        %v1871 = vpack.c.bf16 %v1693, %v1693
        %v1872 = vpack.c.bf16 %v1694, %v1694
        %v1873 = vpack.c.bf16 %v1695, %v1695
        %v1874 = vpack.c.bf16 %v1696, %v1696
        %v1875 = vpack.c.bf16 %v1697, %v1697
        %v1876 = vpack.c.bf16 %v1698, %v1698
        %v1877 = vpack.c.bf16 %v1699, %v1699
        %v1878 = vpack.c.bf16 %v1700, %v1700
        %v1879 = vpack.c.bf16 %v1701, %v1701
        %v1880 = vpack.c.bf16 %v1702, %v1702
        %v1881 = vpack.c.bf16 %v1703, %v1703
        %v1886 = vperm.slane %v1704, 0
        %v1887 = vperm.slane %v1705, 0
        %v1888 = vperm.slane %v1706, 0
        %v1889 = vperm.slane %v1707, 0
        %v1898 = vunpack.c.l.b16 %v1866
        %v1899 = vunpack.c.l.b16 %v1867
        %v1900 = vunpack.c.l.b16 %v1868
        %v1901 = vunpack.c.l.b16 %v1869
        %v1902 = vpack.c.b16 %v1899, %v1898
        %v1903 = vpack.c.b16 %v1901, %v1900
        %v1907 = vsel %vm967, %v1734, 0
        %1909 = vmatpush.bf16.msra.mxu0 0
        %1910 = vmatpush.bf16.msra.mxu0 0
        %1911 = vmatpush.bf16.msra.mxu0 0
        %1912 = vmatpush.bf16.msra.mxu0 0
        %1913 = vmatpush.bf16.msra.mxu0 0
        %1914 = vmatpush.bf16.msra.mxu0 0
        %1915 = vmatpush.bf16.msra.mxu0 %v1903
        %1916 = vmatpush.bf16.msra.mxu0 %v1902
        %1917 = vmatmul.bf16.gmra.mxu0 %v1907
        %v1918 = vpop.f32.mrf.mxu0
        %v1919 = vadd.f32 %v1886, %v1918
        %v1920 = vpop.f32.mrf.mxu0
        %1921 = vdwg.mxu0
        %v1926 = vunpack.c.l.b16 %v1870
        %v1927 = vunpack.c.l.b16 %v1871
        %v1928 = vunpack.c.l.b16 %v1872
        %v1929 = vunpack.c.l.b16 %v1873
        %v1930 = vpack.c.b16 %v1927, %v1926
        %v1931 = vpack.c.b16 %v1929, %v1928
        %1934 = vmatpush.bf16.msra.mxu0 0
        %1935 = vmatpush.bf16.msra.mxu0 0
        %1936 = vmatpush.bf16.msra.mxu0 0
        %1937 = vmatpush.bf16.msra.mxu0 0
        %1938 = vmatpush.bf16.msra.mxu0 0
        %1939 = vmatpush.bf16.msra.mxu0 0
        %1940 = vmatpush.bf16.msra.mxu0 %v1931
        %1941 = vmatpush.bf16.msra.mxu0 %v1930
        %1942 = vmatmul.bf16.gmra.mxu0 %v1907
        %v1943 = vpop.f32.mrf.mxu0
        %v1944 = vadd.f32 %v1887, %v1943
        %v1945 = vpop.f32.mrf.mxu0
        %1946 = vdwg.mxu0
        %v1951 = vunpack.c.l.b16 %v1874
        %v1952 = vunpack.c.l.b16 %v1875
        %v1953 = vunpack.c.l.b16 %v1876
        %v1954 = vunpack.c.l.b16 %v1877
        %v1955 = vpack.c.b16 %v1952, %v1951
        %v1956 = vpack.c.b16 %v1954, %v1953
        %1959 = vmatpush.bf16.msra.mxu0 0
        %1960 = vmatpush.bf16.msra.mxu0 0
        %1961 = vmatpush.bf16.msra.mxu0 0
        %1962 = vmatpush.bf16.msra.mxu0 0
        %1963 = vmatpush.bf16.msra.mxu0 0
        %1964 = vmatpush.bf16.msra.mxu0 0
        %1965 = vmatpush.bf16.msra.mxu0 %v1956
        %1966 = vmatpush.bf16.msra.mxu0 %v1955
        %1967 = vmatmul.bf16.gmra.mxu0 %v1907
        %v1968 = vpop.f32.mrf.mxu0
        %v1969 = vadd.f32 %v1888, %v1968
        %v1970 = vpop.f32.mrf.mxu0
        %1971 = vdwg.mxu0
        %v1976 = vunpack.c.l.b16 %v1878
        %v1977 = vunpack.c.l.b16 %v1879
        %v1978 = vunpack.c.l.b16 %v1880
        %v1979 = vunpack.c.l.b16 %v1881
        %v1980 = vpack.c.b16 %v1977, %v1976
        %v1981 = vpack.c.b16 %v1979, %v1978
        %1984 = vmatpush.bf16.msra.mxu0 0
        %1985 = vmatpush.bf16.msra.mxu0 0
        %1986 = vmatpush.bf16.msra.mxu0 0
        %1987 = vmatpush.bf16.msra.mxu0 0
        %1988 = vmatpush.bf16.msra.mxu0 0
        %1989 = vmatpush.bf16.msra.mxu0 0
        %1990 = vmatpush.bf16.msra.mxu0 %v1981
        %1991 = vmatpush.bf16.msra.mxu0 %v1980
        %1992 = vmatmul.bf16.gmra.mxu0 %v1907
        %v1993 = vpop.f32.mrf.mxu0
        %v1994 = vadd.f32 %v1889, %v1993
        %v1995 = vpop.f32.mrf.mxu0
        %1996 = vdwg.mxu0
        %v1997 = vpack.c.bf16 %v1708, %v1708
        %v1998 = vpack.c.bf16 %v1709, %v1709
        %v1999 = vpack.c.bf16 %v1710, %v1710
        %v2000 = vpack.c.bf16 %v1711, %v1711
        %v2001 = vpack.c.bf16 %v1712, %v1712
        %v2002 = vpack.c.bf16 %v1713, %v1713
        %v2003 = vpack.c.bf16 %v1714, %v1714
        %v2004 = vpack.c.bf16 %v1715, %v1715
        %v2005 = vpack.c.bf16 %v1716, %v1716
        %v2006 = vpack.c.bf16 %v1717, %v1717
        %v2007 = vpack.c.bf16 %v1718, %v1718
        %v2008 = vpack.c.bf16 %v1719, %v1719
        %v2009 = vpack.c.bf16 %v1720, %v1720
        %v2010 = vpack.c.bf16 %v1721, %v1721
        %v2011 = vpack.c.bf16 %v1722, %v1722
        %v2012 = vpack.c.bf16 %v1723, %v1723
        %v2017 = vperm.slane %v1724, 0
        %v2018 = vperm.slane %v1725, 0
        %v2019 = vperm.slane %v1726, 0
        %v2020 = vperm.slane %v1727, 0
        %v2029 = vunpack.c.l.b16 %v1997
        %v2030 = vunpack.c.l.b16 %v1998
        %v2031 = vunpack.c.l.b16 %v1999
        %v2032 = vunpack.c.l.b16 %v2000
        %v2033 = vpack.c.b16 %v2030, %v2029
        %v2034 = vpack.c.b16 %v2032, %v2031
        %2037 = vmatpush.bf16.msra.mxu0 0
        %2038 = vmatpush.bf16.msra.mxu0 0
        %2039 = vmatpush.bf16.msra.mxu0 0
        %2040 = vmatpush.bf16.msra.mxu0 0
        %2041 = vmatpush.bf16.msra.mxu0 0
        %2042 = vmatpush.bf16.msra.mxu0 0
        %2043 = vmatpush.bf16.msra.mxu0 %v2034
        %2044 = vmatpush.bf16.msra.mxu0 %v2033
        %2045 = vmatmul.bf16.gmra.mxu0 %v1907
        %v2046 = vpop.f32.mrf.mxu0
        %v2047 = vadd.f32 %v2017, %v2046
        %v2048 = vpop.f32.mrf.mxu0
        %2049 = vdwg.mxu0
        %v2054 = vunpack.c.l.b16 %v2001
        %v2055 = vunpack.c.l.b16 %v2002
        %v2056 = vunpack.c.l.b16 %v2003
        %v2057 = vunpack.c.l.b16 %v2004
        %v2058 = vpack.c.b16 %v2055, %v2054
        %v2059 = vpack.c.b16 %v2057, %v2056
        %2062 = vmatpush.bf16.msra.mxu0 0
        %2063 = vmatpush.bf16.msra.mxu0 0
        %2064 = vmatpush.bf16.msra.mxu0 0
        %2065 = vmatpush.bf16.msra.mxu0 0
        %2066 = vmatpush.bf16.msra.mxu0 0
        %2067 = vmatpush.bf16.msra.mxu0 0
        %2068 = vmatpush.bf16.msra.mxu0 %v2059
        %2069 = vmatpush.bf16.msra.mxu0 %v2058
        %2070 = vmatmul.bf16.gmra.mxu0 %v1907
        %v2071 = vpop.f32.mrf.mxu0
        %v2072 = vadd.f32 %v2018, %v2071
        %v2073 = vpop.f32.mrf.mxu0
        %2074 = vdwg.mxu0
        %v2079 = vunpack.c.l.b16 %v2005
        %v2080 = vunpack.c.l.b16 %v2006
        %v2081 = vunpack.c.l.b16 %v2007
        %v2082 = vunpack.c.l.b16 %v2008
        %v2083 = vpack.c.b16 %v2080, %v2079
        %v2084 = vpack.c.b16 %v2082, %v2081
        %2087 = vmatpush.bf16.msra.mxu0 0
        %2088 = vmatpush.bf16.msra.mxu0 0
        %2089 = vmatpush.bf16.msra.mxu0 0
        %2090 = vmatpush.bf16.msra.mxu0 0
        %2091 = vmatpush.bf16.msra.mxu0 0
        %2092 = vmatpush.bf16.msra.mxu0 0
        %2093 = vmatpush.bf16.msra.mxu0 %v2084
        %2094 = vmatpush.bf16.msra.mxu0 %v2083
        %2095 = vmatmul.bf16.gmra.mxu0 %v1907
        %v2096 = vpop.f32.mrf.mxu0
        %v2097 = vadd.f32 %v2019, %v2096
        %v2098 = vpop.f32.mrf.mxu0
        %2099 = vdwg.mxu0
        %v2104 = vunpack.c.l.b16 %v2009
        %v2105 = vunpack.c.l.b16 %v2010
        %v2106 = vunpack.c.l.b16 %v2011
        %v2107 = vunpack.c.l.b16 %v2012
        %v2108 = vpack.c.b16 %v2105, %v2104
        %v2109 = vpack.c.b16 %v2107, %v2106
        %2112 = vmatpush.bf16.msra.mxu0 0
        %2113 = vmatpush.bf16.msra.mxu0 0
        %2114 = vmatpush.bf16.msra.mxu0 0
        %2115 = vmatpush.bf16.msra.mxu0 0
        %2116 = vmatpush.bf16.msra.mxu0 0
        %2117 = vmatpush.bf16.msra.mxu0 0
        %2118 = vmatpush.bf16.msra.mxu0 %v2109
        %2119 = vmatpush.bf16.msra.mxu0 %v2108
        %2120 = vmatmul.bf16.gmra.mxu0 %v1907
        %v2121 = vpop.f32.mrf.mxu0
        %v2122 = vadd.f32 %v2020, %v2121
        %v2123 = vpop.f32.mrf.mxu0
        %2124 = vdwg.mxu0
        %v2125 = vpack.c.bf16 %v1788, %v1788
        %v2126 = vpack.c.bf16 %v1813, %v1813
        %v2127 = vpack.c.bf16 %v1838, %v1838
        %v2128 = vpack.c.bf16 %v1863, %v1863
        %v2129 = vpack.c.bf16 %v1919, %v1919
        %v2130 = vpack.c.bf16 %v1944, %v1944
        %v2131 = vpack.c.bf16 %v1969, %v1969
        %v2132 = vpack.c.bf16 %v1994, %v1994
        %v2134 = vsel %vm1323, %v2125, 0
        %v2137 = vsel %vm1323, %v2129, 0
        %2139 = vmatpush.bf16.xpose.msra.mxu0 0
        %2140 = vmatpush.bf16.xpose.msra.mxu0 0
        %2141 = vmatpush.bf16.xpose.msra.mxu0 0
        %2142 = vmatpush.bf16.xpose.msra.mxu0 0
        %2143 = vmatpush.bf16.xpose.msra.mxu0 0
        %2144 = vmatpush.bf16.xpose.msra.mxu0 0
        %2145 = vmatpush.bf16.xpose.msra.mxu0 0
        %2146 = vmatpush.bf16.xpose.msra.mxu0 %v2137
        %2147 = vmatmul.bf16.gmra.mxu0 %v2134
        %v2148 = vpop.f32.mrf.mxu0
        %v2149 = vadd.f32 0.0, %v2148
        %v2150 = vpop.f32.mrf.mxu0
        %2151 = vdwg.mxu0
        %v2153 = vsel %vm1323, %v2126, 0
        %v2156 = vsel %vm1323, %v2130, 0
        %2158 = vmatpush.bf16.xpose.msra.mxu0 0
        %2159 = vmatpush.bf16.xpose.msra.mxu0 0
        %2160 = vmatpush.bf16.xpose.msra.mxu0 0
        %2161 = vmatpush.bf16.xpose.msra.mxu0 0
        %2162 = vmatpush.bf16.xpose.msra.mxu0 0
        %2163 = vmatpush.bf16.xpose.msra.mxu0 0
        %2164 = vmatpush.bf16.xpose.msra.mxu0 0
        %2165 = vmatpush.bf16.xpose.msra.mxu0 %v2156
        %2166 = vmatmul.bf16.gmra.mxu0 %v2153
        %v2167 = vpop.f32.mrf.mxu0
        %v2168 = vadd.f32 0.0, %v2167
        %v2169 = vpop.f32.mrf.mxu0
        %2170 = vdwg.mxu0
        %v2172 = vsel %vm1323, %v2127, 0
        %v2175 = vsel %vm1323, %v2131, 0
        %2177 = vmatpush.bf16.xpose.msra.mxu0 0
        %2178 = vmatpush.bf16.xpose.msra.mxu0 0
        %2179 = vmatpush.bf16.xpose.msra.mxu0 0
        %2180 = vmatpush.bf16.xpose.msra.mxu0 0
        %2181 = vmatpush.bf16.xpose.msra.mxu0 0
        %2182 = vmatpush.bf16.xpose.msra.mxu0 0
        %2183 = vmatpush.bf16.xpose.msra.mxu0 0
        %2184 = vmatpush.bf16.xpose.msra.mxu0 %v2175
        %2185 = vmatmul.bf16.gmra.mxu0 %v2172
        %v2186 = vpop.f32.mrf.mxu0
        %v2187 = vadd.f32 0.0, %v2186
        %v2188 = vpop.f32.mrf.mxu0
        %2189 = vdwg.mxu0
        %v2191 = vsel %vm1323, %v2128, 0
        %v2194 = vsel %vm1323, %v2132, 0
        %2196 = vmatpush.bf16.xpose.msra.mxu0 0
        %2197 = vmatpush.bf16.xpose.msra.mxu0 0
        %2198 = vmatpush.bf16.xpose.msra.mxu0 0
        %2199 = vmatpush.bf16.xpose.msra.mxu0 0
        %2200 = vmatpush.bf16.xpose.msra.mxu0 0
        %2201 = vmatpush.bf16.xpose.msra.mxu0 0
        %2202 = vmatpush.bf16.xpose.msra.mxu0 0
        %2203 = vmatpush.bf16.xpose.msra.mxu0 %v2194
        %2204 = vmatmul.bf16.gmra.mxu0 %v2191
        %v2205 = vpop.f32.mrf.mxu0
        %v2206 = vadd.f32 0.0, %v2205
        %v2207 = vpop.f32.mrf.mxu0
        %2208 = vdwg.mxu0
        %v2209 = vmul.f32 %v2149, 0.35355338
        %v2210 = vmul.f32 %v2168, 0.35355338
        %v2211 = vmul.f32 %v2187, 0.35355338
        %v2212 = vmul.f32 %v2206, 0.35355338
        %v2213 = vsel %vm1323, %v2209, -inf
        %2214 = vmax.xlane.f32.xlu0 %v2213
        %v2215 = vpop.xlane.xlu0 %2214
        %v2216 = vsel %vm1323, %v2210, -inf
        %2217 = vmax.xlane.f32.xlu0 %v2216
        %v2218 = vpop.xlane.xlu0 %2217
        %v2219 = vsel %vm1323, %v2211, -inf
        %2220 = vmax.xlane.f32.xlu0 %v2219
        %v2221 = vpop.xlane.xlu0 %2220
        %v2222 = vsel %vm1323, %v2212, -inf
        %2223 = vmax.xlane.f32.xlu0 %v2222
        %v2224 = vpop.xlane.xlu0 %2223
        %v2225 = vsub.f32 %v2209, %v2215
        %v2226 = vsub.f32 %v2210, %v2218
        %v2227 = vsub.f32 %v2211, %v2221
        %v2228 = vsub.f32 %v2212, %v2224
        %v2229 = vmul.f32 %v2225, 1.442695
        %v2230 = vpow.pop %v2229
        %v2231 = vmul.f32 %v2226, 1.442695
        %v2232 = vpow.pop %v2231
        %v2233 = vmul.f32 %v2227, 1.442695
        %v2234 = vpow.pop %v2233
        %v2235 = vmul.f32 %v2228, 1.442695
        %v2236 = vpow.pop %v2235
        %v2237 = vsel %vm1323, %v2230, 0.0
        %2238 = vadd.xlane.f32.xlu0 %v2237
        %v2239 = vpop.xlane.xlu0 %2238
        %v2240 = vsel %vm1323, %v2232, 0.0
        %2241 = vadd.xlane.f32.xlu0 %v2240
        %v2242 = vpop.xlane.xlu0 %2241
        %v2243 = vsel %vm1323, %v2234, 0.0
        %2244 = vadd.xlane.f32.xlu0 %v2243
        %v2245 = vpop.xlane.xlu0 %2244
        %v2246 = vsel %vm1323, %v2236, 0.0
        %2247 = vadd.xlane.f32.xlu0 %v2246
        %v2248 = vpop.xlane.xlu0 %2247
        %v2249 = vrcp.pop %v2239
        %v2250 = vrcp.pop %v2242
        %v2251 = vrcp.pop %v2245
        %v2252 = vrcp.pop %v2248
        %v2253 = vmul.f32 %v2230, %v2249
        %v2254 = vmul.f32 %v2232, %v2250
        %v2255 = vmul.f32 %v2234, %v2251
        %v2256 = vmul.f32 %v2236, %v2252
        %v2257 = vpack.c.bf16 %v2253, %v2253
        %v2258 = vpack.c.bf16 %v2254, %v2254
        %v2259 = vpack.c.bf16 %v2255, %v2255
        %v2260 = vpack.c.bf16 %v2256, %v2256
        %v2261 = vpack.c.bf16 %v2047, %v2047
        %v2262 = vpack.c.bf16 %v2072, %v2072
        %v2263 = vpack.c.bf16 %v2097, %v2097
        %v2264 = vpack.c.bf16 %v2122, %v2122
        %v2266 = vsel %vm1323, %v2257, 0
        %v2269 = vsel %vm1459, %v2261, 0
        %2271 = vmatpush.bf16.msra.mxu0 0
        %2272 = vmatpush.bf16.msra.mxu0 0
        %2273 = vmatpush.bf16.msra.mxu0 0
        %2274 = vmatpush.bf16.msra.mxu0 0
        %2275 = vmatpush.bf16.msra.mxu0 0
        %2276 = vmatpush.bf16.msra.mxu0 0
        %2277 = vmatpush.bf16.msra.mxu0 0
        %2278 = vmatpush.bf16.msra.mxu0 %v2269
        %2279 = vmatmul.bf16.gmra.mxu0 %v2266
        %v2280 = vpop.f32.mrf.mxu0
        %v2281 = vadd.f32 0.0, %v2280
        %v2282 = vpop.f32.mrf.mxu0
        %2283 = vdwg.mxu0
        %v2285 = vsel %vm1323, %v2258, 0
        %v2288 = vsel %vm1459, %v2262, 0
        %2290 = vmatpush.bf16.msra.mxu0 0
        %2291 = vmatpush.bf16.msra.mxu0 0
        %2292 = vmatpush.bf16.msra.mxu0 0
        %2293 = vmatpush.bf16.msra.mxu0 0
        %2294 = vmatpush.bf16.msra.mxu0 0
        %2295 = vmatpush.bf16.msra.mxu0 0
        %2296 = vmatpush.bf16.msra.mxu0 0
        %2297 = vmatpush.bf16.msra.mxu0 %v2288
        %2298 = vmatmul.bf16.gmra.mxu0 %v2285
        %v2299 = vpop.f32.mrf.mxu0
        %v2300 = vadd.f32 0.0, %v2299
        %v2301 = vpop.f32.mrf.mxu0
        %2302 = vdwg.mxu0
        %v2304 = vsel %vm1323, %v2259, 0
        %v2307 = vsel %vm1459, %v2263, 0
        %2309 = vmatpush.bf16.msra.mxu0 0
        %2310 = vmatpush.bf16.msra.mxu0 0
        %2311 = vmatpush.bf16.msra.mxu0 0
        %2312 = vmatpush.bf16.msra.mxu0 0
        %2313 = vmatpush.bf16.msra.mxu0 0
        %2314 = vmatpush.bf16.msra.mxu0 0
        %2315 = vmatpush.bf16.msra.mxu0 0
        %2316 = vmatpush.bf16.msra.mxu0 %v2307
        %2317 = vmatmul.bf16.gmra.mxu0 %v2304
        %v2318 = vpop.f32.mrf.mxu0
        %v2319 = vadd.f32 0.0, %v2318
        %v2320 = vpop.f32.mrf.mxu0
        %2321 = vdwg.mxu0
        %v2323 = vsel %vm1323, %v2260, 0
        %v2326 = vsel %vm1459, %v2264, 0
        %2328 = vmatpush.bf16.msra.mxu0 0
        %2329 = vmatpush.bf16.msra.mxu0 0
        %2330 = vmatpush.bf16.msra.mxu0 0
        %2331 = vmatpush.bf16.msra.mxu0 0
        %2332 = vmatpush.bf16.msra.mxu0 0
        %2333 = vmatpush.bf16.msra.mxu0 0
        %2334 = vmatpush.bf16.msra.mxu0 0
        %2335 = vmatpush.bf16.msra.mxu0 %v2326
        %2336 = vmatmul.bf16.gmra.mxu0 %v2323
        %v2337 = vpop.f32.mrf.mxu0
        %v2338 = vadd.f32 0.0, %v2337
        %v2339 = vpop.f32.mrf.mxu0
        %2340 = vdwg.mxu0
        %v2341 = vpack.c.bf16 %v2281, %v2281
        %v2342 = vpack.c.bf16 %v2300, %v2300
        %v2343 = vpack.c.bf16 %v2319, %v2319
        %v2344 = vpack.c.bf16 %v2338, %v2338
        %v2345 = vpack.c.bf16 %v1728, %v1728
        %v2346 = vpack.c.bf16 %v1729, %v1729
        %v2347 = vpack.c.bf16 %v1730, %v1730
        %v2348 = vpack.c.bf16 %v1731, %v1731
        %v2350 = vsel %vm1323, %v2341, 0
        %v2353 = vsel %vm1459, %v2345, 0
        %2355 = vmatpush.bf16.msra.mxu0 0
        %2356 = vmatpush.bf16.msra.mxu0 0
        %2357 = vmatpush.bf16.msra.mxu0 0
        %2358 = vmatpush.bf16.msra.mxu0 0
        %2359 = vmatpush.bf16.msra.mxu0 0
        %2360 = vmatpush.bf16.msra.mxu0 0
        %2361 = vmatpush.bf16.msra.mxu0 0
        %2362 = vmatpush.bf16.msra.mxu0 %v2353
        %2363 = vmatmul.bf16.gmra.mxu0 %v2350
        %v2364 = vpop.f32.mrf.mxu0
        %v2365 = vadd.f32 0.0, %v2364
        %v2366 = vpop.f32.mrf.mxu0
        %2367 = vdwg.mxu0
        %v2369 = vsel %vm1323, %v2342, 0
        %v2372 = vsel %vm1459, %v2346, 0
        %2374 = vmatpush.bf16.msra.mxu0 0
        %2375 = vmatpush.bf16.msra.mxu0 0
        %2376 = vmatpush.bf16.msra.mxu0 0
        %2377 = vmatpush.bf16.msra.mxu0 0
        %2378 = vmatpush.bf16.msra.mxu0 0
        %2379 = vmatpush.bf16.msra.mxu0 0
        %2380 = vmatpush.bf16.msra.mxu0 0
        %2381 = vmatpush.bf16.msra.mxu0 %v2372
        %2382 = vmatmul.bf16.gmra.mxu0 %v2369
        %v2383 = vpop.f32.mrf.mxu0
        %v2384 = vadd.f32 0.0, %v2383
        %v2385 = vpop.f32.mrf.mxu0
        %2386 = vdwg.mxu0
        %v2388 = vsel %vm1323, %v2343, 0
        %v2391 = vsel %vm1459, %v2347, 0
        %2393 = vmatpush.bf16.msra.mxu0 0
        %2394 = vmatpush.bf16.msra.mxu0 0
        %2395 = vmatpush.bf16.msra.mxu0 0
        %2396 = vmatpush.bf16.msra.mxu0 0
        %2397 = vmatpush.bf16.msra.mxu0 0
        %2398 = vmatpush.bf16.msra.mxu0 0
        %2399 = vmatpush.bf16.msra.mxu0 0
        %2400 = vmatpush.bf16.msra.mxu0 %v2391
        %2401 = vmatmul.bf16.gmra.mxu0 %v2388
        %v2402 = vpop.f32.mrf.mxu0
        %v2403 = vadd.f32 0.0, %v2402
        %v2404 = vpop.f32.mrf.mxu0
        %2405 = vdwg.mxu0
        %v2407 = vsel %vm1323, %v2344, 0
        %v2410 = vsel %vm1459, %v2348, 0
        %2412 = vmatpush.bf16.msra.mxu0 0
        %2413 = vmatpush.bf16.msra.mxu0 0
        %2414 = vmatpush.bf16.msra.mxu0 0
        %2415 = vmatpush.bf16.msra.mxu0 0
        %2416 = vmatpush.bf16.msra.mxu0 0
        %2417 = vmatpush.bf16.msra.mxu0 0
        %2418 = vmatpush.bf16.msra.mxu0 0
        %2419 = vmatpush.bf16.msra.mxu0 %v2410
        %2420 = vmatmul.bf16.gmra.mxu0 %v2407
        %v2421 = vpop.f32.mrf.mxu0
        %v2422 = vadd.f32 0.0, %v2421
        %v2423 = vpop.f32.mrf.mxu0
        %2424 = vdwg.mxu0
        %v2425 = vsel %vm967, %v2365, 0.0
        %v2426 = vsel %vm967, %v2384, 0.0
        %v2427 = vadd.f32 %v2425, %v2426
        %v2428 = vsel %vm967, %v2403, 0.0
        %v2429 = vadd.f32 %v2427, %v2428
        %v2430 = vsel %vm967, %v2422, 0.0
        %v2431 = vadd.f32 %v2429, %v2430
        %v2433 = vperm.slane %v1732, 0
        %v2435 = vadd.f32 %v2431, %v2433
        %v2436 = vld [vmem:[%s20] sm:$0x1]
        %v2437 = vld [vmem:[%s21] sm:$0x1]
        %v2438 = vsel %vm967, %v2435, 0.0
        %2439 = vadd.xlane.f32.xlu0 %v2438
        %v2440 = vpop.xlane.xlu0 %2439
        %v2441 = vmul.f32 %v2440, %v1639
        %v2442 = vsub.f32 %v2435, %v2441
        %v2443 = vmul.f32 %v2442, %v2442
        %v2444 = vsel %vm967, %v2443, 0.0
        %2445 = vadd.xlane.f32.xlu0 %v2444
        %v2446 = vpop.xlane.xlu0 %2445
        %v2447 = vmul.f32 %v2446, %v1639
        %v2448 = vadd.f32 %v2447, 1e-05
        %v2449 = vrsqrt.pop %v2448
        %v2450 = vmul.f32 %v2449, %v2448
        %v2451 = vmul.f32 %v2450, %v2449
        %v2452 = vmul.f32 0.5, %v2451
        %v2453 = vsub.f32 1.5, %v2452
        %v2454 = vmul.f32 %v2449, %v2453
        %vm2455 = vweird.f32 %v2448
        %vm2456 = vweird.f32 %v2449
        %vm2457 = vmor %vm2455, %vm2456
        %v2458 = vsel %vm2457, %v2449, %v2454
        %v2459 = vmul.f32 %v2442, %v2458
        %v2461 = vperm.slane %v2436, 0
        %v2463 = vmul.f32 %v2459, %v2461
        %v2465 = vperm.slane %v2437, 0
        %v2467 = vadd.f32 %v2463, %v2465
        %v2468 = vadd.f32 %v1667, %v2467
        %v2469 = vld [vmem:[%s22] sm:$0xff]
        %v2470 = vld [vmem:[%s22 + $0x8] sm:$0xff]
        %v2471 = vld [vmem:[%s22 + $0x10] sm:$0xff]
        %v2472 = vld [vmem:[%s22 + $0x18] sm:$0xff]
        %v2473 = vld [vmem:[%s23] sm:$0x1]
        %v2474 = vpack.c.bf16 %v2468, %v2468
        %v2475 = vpack.c.bf16 %v2470, %v2469
        %v2476 = vpack.c.bf16 %v2472, %v2471
        %v2478 = vperm.slane %v2473, 0
        %v2481 = vsel %vm967, %v2474, 0
        %2483 = vmatpush.bf16.msra.mxu0 0
        %2484 = vmatpush.bf16.msra.mxu0 0
        %2485 = vmatpush.bf16.msra.mxu0 0
        %2486 = vmatpush.bf16.msra.mxu0 0
        %2487 = vmatpush.bf16.msra.mxu0 0
        %2488 = vmatpush.bf16.msra.mxu0 0
        %2489 = vmatpush.bf16.msra.mxu0 %v2476
        %2490 = vmatpush.bf16.msra.mxu0 %v2475
        %2491 = vmatmul.bf16.gmra.mxu0 %v2481
        %v2492 = vpop.f32.mrf.mxu0
        %v2493 = vadd.f32 %v2478, %v2492
        %v2494 = vpop.f32.mrf.mxu0
        %2495 = vdwg.mxu0
        %v2496 = vmax.f32 %v2493, 0.0
        %v2497 = vld [vmem:[%s24] sm:$0xff]
        %v2498 = vld [vmem:[%s24 + $0x8] sm:$0xff]
        %v2499 = vld [vmem:[%s24 + $0x10] sm:$0xff]
        %v2500 = vld [vmem:[%s24 + $0x18] sm:$0xff]
        %v2501 = vld [vmem:[%s24 + $0x20] sm:$0xff]
        %v2502 = vld [vmem:[%s24 + $0x28] sm:$0xff]
        %v2503 = vld [vmem:[%s24 + $0x30] sm:$0xff]
        %v2504 = vld [vmem:[%s24 + $0x38] sm:$0xff]
        %v2505 = vld [vmem:[%s25] sm:$0x1]
        %v2506 = vpack.c.bf16 %v2496, %v2496
        %v2507 = vpack.c.bf16 %v2498, %v2497
        %v2508 = vpack.c.bf16 %v2500, %v2499
        %v2509 = vpack.c.bf16 %v2502, %v2501
        %v2510 = vpack.c.bf16 %v2504, %v2503
        %v2512 = vperm.slane %v2505, 0
        %vm2514 = vcmask 523264
        %v2516 = vsel %vm2514, %v2506, 0
        %2518 = vmatpush.bf16.msra.mxu0 0
        %2519 = vmatpush.bf16.msra.mxu0 0
        %2520 = vmatpush.bf16.msra.mxu0 0
        %2521 = vmatpush.bf16.msra.mxu0 0
        %2522 = vmatpush.bf16.msra.mxu0 %v2510
        %2523 = vmatpush.bf16.msra.mxu0 %v2509
        %2524 = vmatpush.bf16.msra.mxu0 %v2508
        %2525 = vmatpush.bf16.msra.mxu0 %v2507
        %2526 = vmatmul.bf16.gmra.mxu0 %v2516
        %v2527 = vpop.f32.mrf.mxu0
        %v2528 = vadd.f32 %v2512, %v2527
        %v2529 = vpop.f32.mrf.mxu0
        %2530 = vdwg.mxu0
        %v2531 = vld [vmem:[%s26] sm:$0x1]
        %v2532 = vld [vmem:[%s27] sm:$0x1]
        %v2533 = vsel %vm967, %v2528, 0.0
        %2534 = vadd.xlane.f32.xlu0 %v2533
        %v2535 = vpop.xlane.xlu0 %2534
        %v2536 = vmul.f32 %v2535, %v1639
        %v2537 = vsub.f32 %v2528, %v2536
        %v2538 = vmul.f32 %v2537, %v2537
        %v2539 = vsel %vm967, %v2538, 0.0
        %2540 = vadd.xlane.f32.xlu0 %v2539
        %v2541 = vpop.xlane.xlu0 %2540
        %v2542 = vmul.f32 %v2541, %v1639
        %v2543 = vadd.f32 %v2542, 1e-05
        %v2544 = vrsqrt.pop %v2543
        %v2545 = vmul.f32 %v2544, %v2543
        %v2546 = vmul.f32 %v2545, %v2544
        %v2547 = vmul.f32 0.5, %v2546
        %v2548 = vsub.f32 1.5, %v2547
        %v2549 = vmul.f32 %v2544, %v2548
        %vm2550 = vweird.f32 %v2543
        %vm2551 = vweird.f32 %v2544
        %vm2552 = vmor %vm2550, %vm2551
        %v2553 = vsel %vm2552, %v2544, %v2549
        %v2554 = vmul.f32 %v2537, %v2553
        %v2556 = vperm.slane %v2531, 0
        %v2558 = vmul.f32 %v2554, %v2556
        %v2560 = vperm.slane %v2532, 0
        %v2562 = vadd.f32 %v2558, %v2560
        %v2563 = vadd.f32 %v2468, %v2562
        %2564 = vst.msk [vmem:[%s849] sm:$0xff] %vm967, %v2563
        %s2565 = sand.u32 %s648, 1
        %s2566 = scalar_lea.sflag [#allocation3], %s2565
        %s2567 = sand.u32 %s648, 1
        %s2568 = smul.addr %s2567, 8
        %s2569 = scalar_lea.vmem [#allocation2], %s2568
        // Predicated region
        $region133: #{tpu_custom_call.1} parent=131 // pred_check
          %p2570 = pneg %p658
        $region134: #{tpu_custom_call.1} parent=131 // pred_check_branch
          %2572 = sbr.rel (%p2570) target = $region136
        $region135: #{tpu_custom_call.1} parent=131 // pred_region
          %2574 = vsyncadd %s2566, 0
          %s2575 = smul.addr %s42, 8
          %s2576 = scalar_lea.hbm %s28, %s2575
          %s2578 = sshll.u32 %s2569, 4
          %s2579 = int_to_ptr.vmem [resolvable:$true] %s2578
          %s2580 = sshll.u32 %s2576, 4
          %s2581 = int_to_ptr.hbm [resolvable:$true] %s2580
          %2583 = dma.vmem_to_hbm [thread:$0]  %s2579, 128, %s2581, %s2566
        $region136: #{tpu_custom_call.1} parent=131 // pred_fallthru
          _
      $region132: #{tpu_custom_call.1} parent=5 // pred_fallthru
        _
      %p2584 = scmp.le.s32.totalorder 2, %s37
      // Predicated region
      $region137: #{tpu_custom_call.1} parent=5 // pred_check
        %p2585 = pneg %p2584
      $region138: #{tpu_custom_call.1} parent=5 // pred_check_branch
        %2587 = sbr.rel (%p2585) target = $region140
      $region139: #{tpu_custom_call.1} parent=5 // pred_region
        %s2588 = ssub.s32 %s37, 2
        // Predicated region
        $region141: #{tpu_custom_call.1} parent=139 // pred_check
          %p2589 = pneg %p664
        $region142: #{tpu_custom_call.1} parent=139 // pred_check_branch
          %2591 = sbr.rel (%p2589) target = $region144
        $region143: #{tpu_custom_call.1} parent=139 // pred_region
          %s2592 = sand.u32 %s649, 1
          %s2593 = scalar_lea.sflag [#allocation3], %s2592
          %s2594 = sand.u32 %s649, 1
          %s2595 = smul.addr %s2594, 8
          %s2596 = scalar_lea.vmem [#allocation2], %s2595
          %2598 = dma.done %s2593, 128
        $region144: #{tpu_custom_call.1} parent=139 // pred_fallthru
          _
      $region140: #{tpu_custom_call.1} parent=5 // pred_fallthru
        _
    $region6: #{tpu_custom_call.1} parent=1 // loop_footer
      %s41 = sadd.s32 1, %s37
    $region7: #{tpu_custom_call.1} parent=1 // loop_footer_branch
      %36 = sbr.rel target = $region3
    $region8: #{tpu_custom_call.1} parent=1 // loop_exit
      _
    %2599 = vsyncpa [#allocation3], 1
    %s2600 = scalar_lea.sflag [#allocation3], 1
    %2601 = vsyncpa %s2600, 1

</llo_original>
